<compile_context>
chip_gen: v5e
topology: v5e:2x2
jax: 0.10.0
libtpu: 0.0.40
codegen_flags: <defaults>
</compile_context>

<pallas_src>
import functools

import jax
import jax.numpy as jnp
from jax.experimental import pallas as pl
from jax.experimental.pallas import tpu as pltpu


def _conv_bn_silu_kernel(x_ref, w_ref, b_ref, o_ref, *, K, TH, W):
    """One (row-tile, cout-tile) of fused 3x3 conv + folded BN + SiLU.

    x_ref : (1, TH+K-1, W, K*Cin_p)  bf16  -- kw taps pre-folded into the lane dim
    w_ref : (K, K*Cin_p, TC)         bf16  -- BN scale already folded into the weights
    b_ref : (1, TC)                  f32   -- folded BN bias
    o_ref : (1, TH, W, TC)           f32
    """
    kcin = x_ref.shape[-1]
    tc = o_ref.shape[-1]

    acc = jnp.zeros((TH * W, tc), jnp.float32)
    # K aligned matmuls (one per kh tap). The kh slice is a major-dim view and the
    # reshape merges full, 8-aligned sublane rows -> no relayout copies, MXU-bound.
    for kh in range(K):
        lhs = x_ref[0, pl.ds(kh, TH), :, :].reshape(TH * W, kcin)
        acc = acc + jnp.dot(lhs, w_ref[kh], preferred_element_type=jnp.float32)

    y = acc + b_ref[0]                                    # folded BN bias (f32)
    sig = pl.reciprocal(1.0 + jnp.exp(-y), approx=True)   # exp + approx rcp -> EUP slot
    y = y * sig                                           # SiLU = y * sigmoid(y)
    o_ref[0] = y.reshape(TH, W, tc)


def conv_forward(x_nchw, w_oihw, gamma, beta, run_mean, run_var,
                 *, k=3, s=1, eps=1e-5, row_tile=8, lane=128):
    """Conv(c1, c2, k=3, s=1).forward: Conv2d(bias=False) + eval BatchNorm2d + SiLU."""
    assert s == 1, "TODO(synk): only stride=1 implemented (RepVgg Conv default)"
    N, Cin, H, W = x_nchw.shape
    Cout = w_oihw.shape[0]
    p = k // 2                                            # autopad('same')

    TH = min(row_tile, H)
    assert H % TH == 0, "row tile must divide H"
    T = H // TH
    THp = TH + 2 * p

    cin_p = ((Cin + lane - 1) // lane) * lane             # lane-dense channel padding
    cout_p = ((Cout + lane - 1) // lane) * lane
    TC = 256 if cout_p % 256 == 0 else 128                # cout tile (multiple of 128)
    CT = cout_p // TC
    kcin = k * cin_p

    # ---- wrapper-side layout transforms & BN folding (plain JAX, one-time cost) ----
    f32 = jnp.float32
    x = jnp.transpose(x_nchw, (0, 2, 3, 1)).astype(f32)                  # NHWC
    x = jnp.pad(x, ((0, 0), (p, p), (p, p), (0, cin_p - Cin)))           # 'same' + lane pad
    # Fold the k kw-taps into the lane dim: (N, H+2p, W, k*Cin_p)
    xcat = jnp.concatenate([x[:, :, kw:kw + W, :] for kw in range(k)], axis=-1)
    # Row tiles with kh halo, (batch, tile) flattened: (N*T, TH+2p, W, k*Cin_p) in bf16.
    xt = jnp.stack([xcat[:, t * TH:t * TH + THp] for t in range(T)], axis=1)
    xt = xt.reshape(N * T, THp, W, kcin).astype(jnp.bfloat16)

    inv_std = 1.0 / jnp.sqrt(run_var.astype(f32) + eps)
    scale = gamma.astype(f32) * inv_std                                  # BN scale
    bias = beta.astype(f32) - run_mean.astype(f32) * scale               # BN bias
    wf = w_oihw.astype(f32) * scale[:, None, None, None]                 # fold scale into w
    wf = jnp.transpose(wf, (2, 3, 1, 0))                                 # (kh, kw, Cin, Cout)
    wf = jnp.pad(wf, ((0, 0), (0, 0), (0, cin_p - Cin), (0, cout_p - Cout)))
    wf = wf.reshape(k, kcin, cout_p).astype(jnp.bfloat16)                # matches xcat lanes
    bias_p = jnp.pad(bias, (0, cout_p - Cout)).reshape(1, cout_p)

    kern = functools.partial(_conv_bn_silu_kernel, K=k, TH=TH, W=W)
    out = pl.pallas_call(
        kern,
        out_shape=jax.ShapeDtypeStruct((N * T, TH, W, cout_p), jnp.float32),
        grid=(N * T, CT),
        in_specs=[
            pl.BlockSpec((1, THp, W, kcin), lambda b, c: (b, 0, 0, 0)),
            pl.BlockSpec((k, kcin, TC), lambda b, c: (0, 0, c)),   # resident weights
            pl.BlockSpec((1, TC), lambda b, c: (0, c)),
        ],
        out_specs=pl.BlockSpec((1, TH, W, TC), lambda b, c: (b, 0, 0, c)),
        compiler_params=pltpu.CompilerParams(
            dimension_semantics=("parallel", "parallel"),
            vmem_limit_bytes=32 * 1024 * 1024),
    )(xt, wf, bias_p)

    out = out.reshape(N, H, W, cout_p)[..., :Cout]                       # drop lane padding
    return jnp.transpose(out, (0, 3, 1, 2))                              # back to NCHW


def _reference(x_nchw, w_oihw, gamma, beta, run_mean, run_var, *, k=3, eps=1e-5):
    """Pure-JAX f32 reference matching PyTorch Conv2d + eval BatchNorm2d + SiLU."""
    p = k // 2
    y = jax.lax.conv_general_dilated(
        x_nchw.astype(jnp.float32), w_oihw.astype(jnp.float32),
        window_strides=(1, 1), padding=((p, p), (p, p)),
        dimension_numbers=("NCHW", "OIHW", "NCHW"))
    inv_std = 1.0 / jnp.sqrt(run_var + eps)
    y = (y - run_mean[None, :, None, None]) * inv_std[None, :, None, None]
    y = y * gamma[None, :, None, None] + beta[None, :, None, None]
    return y * jax.nn.sigmoid(y)


if __name__ == "__main__":
    key = jax.random.PRNGKey(0)
    k_x, k_w, k_g, k_b, k_m, k_v = jax.random.split(key, 6)

    N, C1, C2, H, W, K = 2, 4, 8, 16, 16, 3          # Conv(c1=4, c2=8, k=3)

    x = jax.random.normal(k_x, (N, C1, H, W), jnp.float32)
    w = jax.random.normal(k_w, (C2, C1, K, K), jnp.float32) * 0.1       # conv weight (no bias)
    gamma = 1.0 + 0.1 * jax.random.normal(k_g, (C2,), jnp.float32)      # bn.weight
    beta = 0.1 * jax.random.normal(k_b, (C2,), jnp.float32)             # bn.bias
    run_mean = 0.1 * jax.random.normal(k_m, (C2,), jnp.float32)         # bn.running_mean
    run_var = jnp.abs(1.0 + 0.1 * jax.random.normal(k_v, (C2,), jnp.float32))  # bn.running_var

    out = conv_forward(x, w, gamma, beta, run_mean, run_var, k=K)
    out = jax.block_until_ready(out)

    ref = _reference(x, w, gamma, beta, run_mean, run_var, k=K)
    assert out.shape == (N, C2, H, W)
    # Tolerance accounts for bf16 MXU operands and the EUP approx-reciprocal in SiLU.
    assert jnp.max(jnp.abs(out - ref)) < 5e-2, "mismatch vs reference"

    print("KERNEL_OK")
</pallas_src>

<mosaic_0001>
module attributes {stable_mosaic.version = 11 : i64} {
  func.func @_conv_bn_silu_kernel(%arg0: i32, %arg1: i32, %arg2: memref<1x10x16x384xbf16, #tpu.memory_space<vmem>>, %arg3: memref<3x384x128xbf16, #tpu.memory_space<vmem>>, %arg4: memref<1x128xf32, #tpu.memory_space<vmem>>, %arg5: memref<1x8x16x128xf32, #tpu.memory_space<vmem>>) attributes {dimension_semantics = [#tpu.dimension_semantics<parallel>, #tpu.dimension_semantics<parallel>], iteration_bounds = array<i64: 4, 1>, scalar_prefetch = 0 : i64, scratch_operands = 0 : i64, tpu.core_type = #tpu.core_type<tc>, window_params = [{transform_indices = @transform_0, window_bounds = array<i64: 1, 10, 16, 384>}, {transform_indices = @transform_1, window_bounds = array<i64: 3, 384, 128>}, {transform_indices = @transform_2, window_bounds = array<i64: 1, 128>}, {transform_indices = @transform_3, window_bounds = array<i64: 1, 8, 16, 128>}]} {
    %cst = arith.constant 0.000000e+00 : f32
    %0 = vector.broadcast %cst : f32 to vector<128x128xf32>
    %c0 = arith.constant 0 : index
    %c0_0 = arith.constant 0 : index
    %c0_1 = arith.constant 0 : index
    %c0_2 = arith.constant 0 : index
    %1 = vector.load %arg2[%c0, %c0_0, %c0_1, %c0_2] : memref<1x10x16x384xbf16, #tpu.memory_space<vmem>>, vector<1x8x16x384xbf16>
    %2 = vector.shape_cast %1 : vector<1x8x16x384xbf16> to vector<8x16x384xbf16>
    %3 = vector.shape_cast %2 : vector<8x16x384xbf16> to vector<128x384xbf16>
    %c0_3 = arith.constant 0 : index
    %c0_4 = arith.constant 0 : index
    %c0_5 = arith.constant 0 : index
    %4 = vector.load %arg3[%c0_3, %c0_4, %c0_5] : memref<3x384x128xbf16, #tpu.memory_space<vmem>>, vector<1x384x128xbf16>
    %5 = vector.shape_cast %4 : vector<1x384x128xbf16> to vector<384x128xbf16>
    %cst_6 = arith.constant dense<0.000000e+00> : vector<128x128xf32>
    %6 = tpu.matmul %3, %5, %cst_6 {dimension_numbers = #tpu.dot_dimension_numbers<[1], [0], [0], [1], [0, 0, 1, 1], [], []>} : vector<128x384xbf16>, vector<384x128xbf16>, vector<128x128xf32> -> vector<128x128xf32>
    %7 = arith.addf %0, %6 : vector<128x128xf32>
    %c0_7 = arith.constant 0 : index
    %c1 = arith.constant 1 : index
    %c0_8 = arith.constant 0 : index
    %c0_9 = arith.constant 0 : index
    %8 = vector.load %arg2[%c0_7, %c1, %c0_8, %c0_9] : memref<1x10x16x384xbf16, #tpu.memory_space<vmem>>, vector<1x8x16x384xbf16>
    %9 = vector.shape_cast %8 : vector<1x8x16x384xbf16> to vector<8x16x384xbf16>
    %10 = vector.shape_cast %9 : vector<8x16x384xbf16> to vector<128x384xbf16>
    %c1_10 = arith.constant 1 : index
    %c0_11 = arith.constant 0 : index
    %c0_12 = arith.constant 0 : index
    %11 = vector.load %arg3[%c1_10, %c0_11, %c0_12] : memref<3x384x128xbf16, #tpu.memory_space<vmem>>, vector<1x384x128xbf16>
    %12 = vector.shape_cast %11 : vector<1x384x128xbf16> to vector<384x128xbf16>
    %cst_13 = arith.constant dense<0.000000e+00> : vector<128x128xf32>
    %13 = tpu.matmul %10, %12, %cst_13 {dimension_numbers = #tpu.dot_dimension_numbers<[1], [0], [0], [1], [0, 0, 1, 1], [], []>} : vector<128x384xbf16>, vector<384x128xbf16>, vector<128x128xf32> -> vector<128x128xf32>
    %14 = arith.addf %7, %13 : vector<128x128xf32>
    %c0_14 = arith.constant 0 : index
    %c2 = arith.constant 2 : index
    %c0_15 = arith.constant 0 : index
    %c0_16 = arith.constant 0 : index
    %15 = vector.load %arg2[%c0_14, %c2, %c0_15, %c0_16] : memref<1x10x16x384xbf16, #tpu.memory_space<vmem>>, vector<1x8x16x384xbf16>
    %16 = vector.shape_cast %15 : vector<1x8x16x384xbf16> to vector<8x16x384xbf16>
    %17 = vector.shape_cast %16 : vector<8x16x384xbf16> to vector<128x384xbf16>
    %c2_17 = arith.constant 2 : index
    %c0_18 = arith.constant 0 : index
    %c0_19 = arith.constant 0 : index
    %18 = vector.load %arg3[%c2_17, %c0_18, %c0_19] : memref<3x384x128xbf16, #tpu.memory_space<vmem>>, vector<1x384x128xbf16>
    %19 = vector.shape_cast %18 : vector<1x384x128xbf16> to vector<384x128xbf16>
    %cst_20 = arith.constant dense<0.000000e+00> : vector<128x128xf32>
    %20 = tpu.matmul %17, %19, %cst_20 {dimension_numbers = #tpu.dot_dimension_numbers<[1], [0], [0], [1], [0, 0, 1, 1], [], []>} : vector<128x384xbf16>, vector<384x128xbf16>, vector<128x128xf32> -> vector<128x128xf32>
    %21 = arith.addf %14, %20 : vector<128x128xf32>
    %c0_21 = arith.constant 0 : index
    %c0_22 = arith.constant 0 : index
    %22 = vector.load %arg4[%c0_21, %c0_22] : memref<1x128xf32, #tpu.memory_space<vmem>>, vector<1x128xf32>
    %23 = vector.shape_cast %22 : vector<1x128xf32> to vector<128xf32>
    %24 = vector.shape_cast %23 : vector<128xf32> to vector<1x128xf32>
    %25 = vector.broadcast %24 : vector<1x128xf32> to vector<128x128xf32>
    %26 = arith.addf %21, %25 : vector<128x128xf32>
    %cst_23 = arith.constant 0.000000e+00 : f32
    %27 = vector.broadcast %cst_23 : f32 to vector<128x128xf32>
    %28 = arith.subf %27, %26 : vector<128x128xf32>
    %29 = math.exp %28 : vector<128x128xf32>
    %cst_24 = arith.constant 1.000000e+00 : f32
    %30 = vector.broadcast %cst_24 : f32 to vector<128x128xf32>
    %31 = arith.addf %30, %29 : vector<128x128xf32>
    %32 = tpu.reciprocal %31 {approx = true} : vector<128x128xf32> -> vector<128x128xf32>
    %33 = arith.mulf %26, %32 : vector<128x128xf32>
    %34 = vector.shape_cast %33 : vector<128x128xf32> to vector<8x16x128xf32>
    %c0_25 = arith.constant 0 : index
    %c0_26 = arith.constant 0 : index
    %c0_27 = arith.constant 0 : index
    %c0_28 = arith.constant 0 : index
    %35 = vector.load %arg5[%c0_25, %c0_26, %c0_27, %c0_28] : memref<1x8x16x128xf32, #tpu.memory_space<vmem>>, vector<1x8x16x128xf32>
    %36 = vector.shape_cast %35 : vector<1x8x16x128xf32> to vector<8x16x128xf32>
    %37 = vector.shape_cast %34 : vector<8x16x128xf32> to vector<1x8x16x128xf32>
    tpu.vector_store %arg5[%c0_25, %c0_26, %c0_27, %c0_28], %37 {strides = array<i32>} : memref<1x8x16x128xf32, #tpu.memory_space<vmem>>, vector<1x8x16x128xf32>,
    return
  }
  func.func @transform_0(%arg0: i32, %arg1: i32) -> (i32, i32, i32, i32) {
    %c0_i32 = arith.constant 0 : i32
    %c0_i32_0 = arith.constant 0 : i32
    %c0_i32_1 = arith.constant 0 : i32
    %c0_i32_2 = arith.constant 0 : i32
    return %arg0, %c0_i32, %c0_i32_0, %c0_i32_1 : i32, i32, i32, i32
  }
  func.func @transform_1(%arg0: i32, %arg1: i32) -> (i32, i32, i32) {
    %c0_i32 = arith.constant 0 : i32
    %c0_i32_0 = arith.constant 0 : i32
    %c0_i32_1 = arith.constant 0 : i32
    return %c0_i32, %c0_i32_0, %arg1 : i32, i32, i32
  }
  func.func @transform_2(%arg0: i32, %arg1: i32) -> (i32, i32) {
    %c0_i32 = arith.constant 0 : i32
    %c0_i32_0 = arith.constant 0 : i32
    return %c0_i32, %arg1 : i32, i32
  }
  func.func @transform_3(%arg0: i32, %arg1: i32) -> (i32, i32, i32, i32) {
    %c0_i32 = arith.constant 0 : i32
    %c0_i32_0 = arith.constant 0 : i32
    %c0_i32_1 = arith.constant 0 : i32
    return %arg0, %c0_i32, %c0_i32_0, %arg1 : i32, i32, i32, i32
  }
}

</mosaic_0001>

<llo_original>
// kernel: tpu_custom_call.1
$region0: #{tpu_custom_call.1}
  #allocation0 [shape = 'u32[]', space=smem, size = 0x4, offset = 0x4, fixed_abs, tag = 'smem constant byte address 0x4 - core index']
  #allocation1 [shape = 'u32[72,128]{1,0:T(1,128)}', space=vmem, size = 0x9000, scoped, tag = 'internal scratch']
  %s0 = inlined_call_operand.hbm [shape: bf16[4,10,16,384], index: 0, kind: input, shape index: {}]
  %s1 = inlined_call_operand.hbm [shape: bf16[3,384,128], index: 1, kind: input, shape index: {}]
  %s2 = inlined_call_operand.vmem [shape: f32[1,128], index: 2, kind: input, shape index: {}]
  %s3 = inlined_call_operand.hbm [shape: f32[4,8,16,128], index: 3, kind: output, shape index: {}]
  %s4 = sld [smem:[#allocation0]]
  $region53: #{tpu_custom_call.1} parent=0
    _
  %s6 = ssub.s32 1, %s4
  %s7 = scalar_select 0, %s6, %s4
  $region1: #{tpu_custom_call.1} parent=0
    #allocation2 [shape = 'u8[245760]{0}', space=vmem, size = 0x3c000, scoped, tag = 'input window, operand 0']
    #allocation3 [shape = 's32[2]{0}', space=sflag, size = 0x8, scoped, tag = 'scoped memory for tpu_custom_call.1']
    #allocation4 [shape = 's32[2]{0}', space=sflag, size = 0x8, scoped, tag = 'scoped memory for tpu_custom_call.1']
    #allocation5 [shape = 'u8[294912]{0}', space=vmem, size = 0x48000, scoped, tag = 'input window, operand 1, single buffered']
    #allocation6 [shape = 's32[1]{0}', space=sflag, size = 0x4, scoped, tag = 'scoped memory for tpu_custom_call.1']
    #allocation7 [shape = 'u8[131072]{0}', space=vmem, size = 0x20000, scoped, tag = 'output window, operand 0']
    %8 = vsyncpa [#allocation3], 0
    %s9 = scalar_lea.sflag [#allocation3], 1
    %10 = vsyncpa %s9, 0
    %11 = vsyncpa [#allocation6], 0
    %12 = vsyncpa [#allocation4], 0
    %s13 = scalar_lea.sflag [#allocation4], 1
    %14 = vsyncpa %s13, 0
    loop: start=0, step=1, limit=6
    $region2: #{tpu_custom_call.1} parent=1 // loop_pre_header
      _
    $region3: #{tpu_custom_call.1} parent=1 // loop_header
      %s16 = sphi 0, %s20
      %p17 = scmp.ge.s32.totalorder %s16, 6
      %s23 = sphi 0, %s35
      %s24 = sphi 0, %s31
      %s25 = sphi 0, %s23
      %s26 = sphi 0, %s24
      %s27 = sphi 0, %s25
      %s28 = sphi 0, %s26
      %s38 = sphi 0, %s40
      %s41 = sphi 0, %s38
      %s42 = sphi 0, %s41
      %s58 = sphi 0, %s42
      %s64 = sphi 0, %s66
      %s67 = sphi 0, %s64
      %s68 = sphi 0, %s67
      %s84 = sphi 0, %s68
      %s90 = sphi 0, %s92
      %s93 = sphi 0, %s90
      %s94 = sphi 0, %s93
      %s110 = sphi 0, %s94
      %s118 = sphi 0, %s120
      %s121 = sphi 0, %s118
      %s122 = sphi 0, %s121
      %s138 = sphi 0, %s122
    $region4: #{tpu_custom_call.1} parent=1 // loop_header_branch
      %19 = sbr.rel (%p17) target = $region8
    $region5: #{tpu_custom_call.1} parent=1 // loop_body
      %s21 = ssub.s32 %s16, 1
      %s22 = ssub.s32 %s16, 2
      %s29 = sadd.s32 1, %s24
      %p30 = scmp.ge.s32.totalorder %s29, 1
      %s31 = scalar_select %p30, 0, %s29
      %s32 = sadd.s32 1, %s23
      %s33 = scalar_select %p30, %s32, %s23
      %p34 = scmp.ge.s32.totalorder %s33, 4
      %s35 = scalar_select %p34, 0, %s33
      %s36 = ssub.s32 %s23, %s35
      %p37 = scmp.eq.s32.totalorder %s36, 0
      %s39 = sadd.s32 %s38, 1
      %s40 = scalar_select %p37, %s38, %s39
      %p43 = pneg %p37
      %p44 = scmp.eq.s32.totalorder %s16, 3
      %p45 = por %p43, %p44
      %p46 = scmp.ne.s32.totalorder %s38, %s41
      %p47 = scmp.eq.s32.totalorder %s16, 0
      %p48 = por %p46, %p47
      %p49 = scmp.ne.s32.totalorder %s38, %s41
      %p50 = scmp.eq.s32.totalorder %s21, 3
      %p51 = por %p49, %p50
      %p52 = scmp.ne.s32.totalorder %s41, %s42
      %p53 = scmp.eq.s32.totalorder %s21, 0
      %p54 = por %p52, %p53
      %p55 = scmp.ne.s32.totalorder %s41, %s42
      %p56 = scmp.eq.s32.totalorder %s22, 3
      %p57 = por %p55, %p56
      %p59 = scmp.ne.s32.totalorder %s42, %s58
      %p60 = scmp.eq.s32.totalorder %s22, 0
      %p61 = por %p59, %p60
      %s62 = ssub.s32 %s24, %s31
      %p63 = scmp.eq.s32.totalorder %s62, 0
      %s65 = sadd.s32 %s64, 1
      %s66 = scalar_select %p63, %s64, %s65
      %p69 = pneg %p63
      %p70 = scmp.eq.s32.totalorder %s16, 3
      %p71 = por %p69, %p70
      %p72 = scmp.ne.s32.totalorder %s64, %s67
      %p73 = scmp.eq.s32.totalorder %s16, 0
      %p74 = por %p72, %p73
      %p75 = scmp.ne.s32.totalorder %s64, %s67
      %p76 = scmp.eq.s32.totalorder %s21, 3
      %p77 = por %p75, %p76
      %p78 = scmp.ne.s32.totalorder %s67, %s68
      %p79 = scmp.eq.s32.totalorder %s21, 0
      %p80 = por %p78, %p79
      %p81 = scmp.ne.s32.totalorder %s67, %s68
      %p82 = scmp.eq.s32.totalorder %s22, 3
      %p83 = por %p81, %p82
      %p85 = scmp.ne.s32.totalorder %s68, %s84
      %p86 = scmp.eq.s32.totalorder %s22, 0
      %p87 = por %p85, %p86
      %s88 = ssub.s32 %s24, %s31
      %p89 = scmp.eq.s32.totalorder %s88, 0
      %s91 = sadd.s32 %s90, 1
      %s92 = scalar_select %p89, %s90, %s91
      %p95 = pneg %p89
      %p96 = scmp.eq.s32.totalorder %s16, 3
      %p97 = por %p95, %p96
      %p98 = scmp.ne.s32.totalorder %s90, %s93
      %p99 = scmp.eq.s32.totalorder %s16, 0
      %p100 = por %p98, %p99
      %p101 = scmp.ne.s32.totalorder %s90, %s93
      %p102 = scmp.eq.s32.totalorder %s21, 3
      %p103 = por %p101, %p102
      %p104 = scmp.ne.s32.totalorder %s93, %s94
      %p105 = scmp.eq.s32.totalorder %s21, 0
      %p106 = por %p104, %p105
      %p107 = scmp.ne.s32.totalorder %s93, %s94
      %p108 = scmp.eq.s32.totalorder %s22, 3
      %p109 = por %p107, %p108
      %p111 = scmp.ne.s32.totalorder %s94, %s110
      %p112 = scmp.eq.s32.totalorder %s22, 0
      %p113 = por %p111, %p112
      %s114 = ssub.s32 %s23, %s35
      %s115 = ssub.s32 %s24, %s31
      %s116 = sor.u32 %s114, %s115
      %p117 = scmp.eq.s32.totalorder %s116, 0
      %s119 = sadd.s32 %s118, 1
      %s120 = scalar_select %p117, %s118, %s119
      %p123 = pneg %p117
      %p124 = scmp.eq.s32.totalorder %s16, 3
      %p125 = por %p123, %p124
      %p126 = scmp.ne.s32.totalorder %s118, %s121
      %p127 = scmp.eq.s32.totalorder %s16, 0
      %p128 = por %p126, %p127
      %p129 = scmp.ne.s32.totalorder %s118, %s121
      %p130 = scmp.eq.s32.totalorder %s21, 3
      %p131 = por %p129, %p130
      %p132 = scmp.ne.s32.totalorder %s121, %s122
      %p133 = scmp.eq.s32.totalorder %s21, 0
      %p134 = por %p132, %p133
      %p135 = scmp.ne.s32.totalorder %s121, %s122
      %p136 = scmp.eq.s32.totalorder %s22, 3
      %p137 = por %p135, %p136
      %p139 = scmp.ne.s32.totalorder %s122, %s138
      %p140 = scmp.eq.s32.totalorder %s22, 0
      %p141 = por %p139, %p140
      %p142 = scmp.le.s32.totalorder 1, %s16
      %p143 = scmp.lt.s32.totalorder %s16, 5
      %p144 = pnand %p142, %p143
      %p145 = pneg %p144
      // Predicated region
      $region9: #{tpu_custom_call.1} parent=5 // pred_check
        _
      $region10: #{tpu_custom_call.1} parent=5 // pred_check_branch
        %147 = sbr.rel (%p144) target = $region12
      $region11: #{tpu_custom_call.1} parent=5 // pred_region
        %s148 = ssub.s32 %s16, 1
        // Predicated region
        $region13: #{tpu_custom_call.1} parent=11 // pred_check
          %p149 = pneg %p80
        $region14: #{tpu_custom_call.1} parent=11 // pred_check_branch
          %151 = sbr.rel (%p149) target = $region16
        $region15: #{tpu_custom_call.1} parent=11 // pred_region
          %153 = vsyncadd [#allocation6], 0
          %s154 = smul.addr %s26, 4
          %s155 = scalar_lea.hbm %s1, %s154
          %s156 = sshll.u32 %s155, 4
          %s157 = int_to_ptr.hbm [resolvable:$true] %s156
          %s158 = sshll.u32 [#allocation5], 4
          %s159 = int_to_ptr.vmem [resolvable:$true] %s158
          %164 = dma.hbm_to_vmem [thread:$0]  %s157, 9216, %s159, [#allocation6], 64, 64, 4
        $region16: #{tpu_custom_call.1} parent=11 // pred_fallthru
          _
        // Predicated region
        $region17: #{tpu_custom_call.1} parent=11 // pred_check
          %p165 = pneg %p106
        $region18: #{tpu_custom_call.1} parent=11 // pred_check_branch
          %167 = sbr.rel (%p165) target = $region20
        $region19: #{tpu_custom_call.1} parent=11 // pred_region
          %p168 = scmp.lt.s32.totalorder %s26, 0
          %s169 = scalar_select %p168, %s26, 0
          %s170 = scalar_lea.vmem %s2, %s169
        $region20: #{tpu_custom_call.1} parent=11 // pred_fallthru
          _
      $region12: #{tpu_custom_call.1} parent=5 // pred_fallthru
        _
      %p171 = scmp.lt.s32.totalorder %s16, 4
      // Predicated region
      $region21: #{tpu_custom_call.1} parent=5 // pred_check
        %p172 = pneg %p171
      $region22: #{tpu_custom_call.1} parent=5 // pred_check_branch
        %174 = sbr.rel (%p172) target = $region24
      $region23: #{tpu_custom_call.1} parent=5 // pred_region
        // Predicated region
        $region25: #{tpu_custom_call.1} parent=23 // pred_check
          %p175 = pneg %p48
        $region26: #{tpu_custom_call.1} parent=23 // pred_check_branch
          %177 = sbr.rel (%p175) target = $region28
        $region27: #{tpu_custom_call.1} parent=23 // pred_region
          %s178 = sand.u32 %s38, 1
          %s179 = scalar_lea.sflag [#allocation3], %s178
          %s180 = sand.u32 %s38, 1
          %s181 = smul.addr %s180, 240
          %s182 = scalar_lea.vmem [#allocation2], %s181
          %184 = vsyncadd %s179, 0
          %s185 = smul.addr %s23, 60
          %s186 = smul.addr %s185, 4
          %s187 = scalar_lea.hbm %s0, %s186
          %s188 = sshll.u32 %s187, 4
          %s189 = int_to_ptr.hbm [resolvable:$true] %s188
          %s190 = sshll.u32 %s182, 4
          %s191 = int_to_ptr.vmem [resolvable:$true] %s190
          %196 = dma.hbm_to_vmem [thread:$0]  %s189, 3840, %s191, %s179, 192, 192, 12
        $region28: #{tpu_custom_call.1} parent=23 // pred_fallthru
          _
      $region24: #{tpu_custom_call.1} parent=5 // pred_fallthru
        _
      %p197 = scmp.le.s32.totalorder 1, %s16
      %p198 = scmp.lt.s32.totalorder %s16, 5
      %p199 = pnand %p197, %p198
      %p200 = pneg %p199
      // Predicated region
      $region29: #{tpu_custom_call.1} parent=5 // pred_check
        _
      $region30: #{tpu_custom_call.1} parent=5 // pred_check_branch
        %202 = sbr.rel (%p199) target = $region32
      $region31: #{tpu_custom_call.1} parent=5 // pred_region
        %s203 = ssub.s32 %s16, 1
        %s204 = sand.u32 %s41, 1
        %s205 = scalar_lea.sflag [#allocation3], %s204
        %s206 = sand.u32 %s41, 1
        %s207 = smul.addr %s206, 240
        %s208 = scalar_lea.vmem [#allocation2], %s207
        // Predicated region
        $region33: #{tpu_custom_call.1} parent=31 // pred_check
          %p209 = pneg %p54
        $region34: #{tpu_custom_call.1} parent=31 // pred_check_branch
          %211 = sbr.rel (%p209) target = $region36
        $region35: #{tpu_custom_call.1} parent=31 // pred_region
          %213 = dma.done %s205, 3840
        $region36: #{tpu_custom_call.1} parent=31 // pred_fallthru
          _
        // Predicated region
        $region37: #{tpu_custom_call.1} parent=31 // pred_check
          %p214 = pneg %p80
        $region38: #{tpu_custom_call.1} parent=31 // pred_check_branch
          %216 = sbr.rel (%p214) target = $region40
        $region39: #{tpu_custom_call.1} parent=31 // pred_region
          %218 = dma.done [#allocation6], 9216
        $region40: #{tpu_custom_call.1} parent=31 // pred_fallthru
          _
        %s219 = sand.u32 %s41, 1
        %s220 = scalar_lea.sflag [#allocation3], %s219
        %s221 = sand.u32 %s41, 1
        %s222 = smul.addr %s221, 240
        %s223 = scalar_lea.vmem [#allocation2], %s222
        %p224 = pneg %p54
        %p225 = pneg %p51
        %p226 = pneg %p80
        %p227 = pneg %p77
        %p228 = scmp.lt.s32.totalorder %s26, 0
        %s229 = scalar_select %p228, %s26, 0
        %s230 = scalar_lea.vmem %s2, %s229
        %p231 = pneg %p106
        %p232 = pneg %p103
        %p233 = pneg %p134
        %p234 = pneg %p131
        %s235 = sand.u32 %s121, 1
        %s236 = scalar_lea.sflag [#allocation4], %s235
        %s237 = sand.u32 %s121, 1
        %s238 = smul.addr %s237, 128
        %s239 = scalar_lea.vmem [#allocation7], %s238
        %p240 = scmp.lt.s32.totalorder %s26, 0
        %s241 = scalar_select %p240, %s26, 0
        %s242 = scalar_lea.vmem %s2, %s241
        %v243 = vld [vmem:[%s208] sm:$0xff]
        %v244 = vld [vmem:[%s208 + $0x8] sm:$0xf]
        %v245 = vld [vmem:[%s208 + $0xc] sm:$0xff]
        %v246 = vld [vmem:[%s208 + $0x14] sm:$0xf]
        %v247 = vld [vmem:[%s208 + $0x18] sm:$0xff]
        %v248 = vld [vmem:[%s208 + $0x20] sm:$0xf]
        %v249 = vld [vmem:[%s208 + $0x24] sm:$0xff]
        %v250 = vld [vmem:[%s208 + $0x2c] sm:$0xf]
        %v251 = vld [vmem:[%s208 + $0x30] sm:$0xff]
        %v252 = vld [vmem:[%s208 + $0x38] sm:$0xf]
        %v253 = vld [vmem:[%s208 + $0x3c] sm:$0xff]
        %v254 = vld [vmem:[%s208 + $0x44] sm:$0xf]
        %v255 = vld [vmem:[%s208 + $0x48] sm:$0xff]
        %v256 = vld [vmem:[%s208 + $0x50] sm:$0xf]
        %v257 = vld [vmem:[%s208 + $0x54] sm:$0xff]
        %v258 = vld [vmem:[%s208 + $0x5c] sm:$0xf]
        %v259 = vld [vmem:[%s208 + $0x60] sm:$0xff]
        %v260 = vld [vmem:[%s208 + $0x68] sm:$0xf]
        %v261 = vld [vmem:[%s208 + $0x6c] sm:$0xff]
        %v262 = vld [vmem:[%s208 + $0x74] sm:$0xf]
        %v263 = vld [vmem:[%s208 + $0x78] sm:$0xff]
        %v264 = vld [vmem:[%s208 + $0x80] sm:$0xf]
        %v265 = vld [vmem:[%s208 + $0x84] sm:$0xff]
        %v266 = vld [vmem:[%s208 + $0x8c] sm:$0xf]
        %v267 = vld [vmem:[%s208 + $0x90] sm:$0xff]
        %v268 = vld [vmem:[%s208 + $0x98] sm:$0xf]
        %v269 = vld [vmem:[%s208 + $0x9c] sm:$0xff]
        %v270 = vld [vmem:[%s208 + $0xa4] sm:$0xf]
        %v271 = vld [vmem:[%s208 + $0xa8] sm:$0xff]
        %v272 = vld [vmem:[%s208 + $0xb0] sm:$0xf]
        %v273 = vld [vmem:[%s208 + $0xb4] sm:$0xff]
        %v274 = vld [vmem:[%s208 + $0xbc] sm:$0xf]
        %v275 = vld [vmem:[#allocation5] sm:$0xf]
        %v276 = vld [vmem:[#allocation5 + $0x4] sm:$0xf]
        %v277 = vld [vmem:[#allocation5 + $0x8] sm:$0xf]
        %v278 = vld [vmem:[#allocation5 + $0xc] sm:$0xf]
        %v279 = vld [vmem:[#allocation5 + $0x10] sm:$0xf]
        %v280 = vld [vmem:[#allocation5 + $0x14] sm:$0xf]
        %v281 = vld [vmem:[#allocation5 + $0x18] sm:$0xf]
        %v282 = vld [vmem:[#allocation5 + $0x1c] sm:$0xf]
        %v283 = vld [vmem:[#allocation5 + $0x20] sm:$0xf]
        %v284 = vld [vmem:[#allocation5 + $0x24] sm:$0xf]
        %v285 = vld [vmem:[#allocation5 + $0x28] sm:$0xf]
        %v286 = vld [vmem:[#allocation5 + $0x2c] sm:$0xf]
        %v287 = vld [vmem:[#allocation5 + $0x30] sm:$0xf]
        %v288 = vld [vmem:[#allocation5 + $0x34] sm:$0xf]
        %v289 = vld [vmem:[#allocation5 + $0x38] sm:$0xf]
        %v290 = vld [vmem:[#allocation5 + $0x3c] sm:$0xf]
        %v291 = vld [vmem:[#allocation5 + $0x40] sm:$0xf]
        %v292 = vld [vmem:[#allocation5 + $0x44] sm:$0xf]
        %v293 = vld [vmem:[#allocation5 + $0x48] sm:$0xf]
        %v294 = vld [vmem:[#allocation5 + $0x4c] sm:$0xf]
        %v295 = vld [vmem:[#allocation5 + $0x50] sm:$0xf]
        %v296 = vld [vmem:[#allocation5 + $0x54] sm:$0xf]
        %v297 = vld [vmem:[#allocation5 + $0x58] sm:$0xf]
        %v298 = vld [vmem:[#allocation5 + $0x5c] sm:$0xf]
        %v299 = vld [vmem:[#allocation5 + $0x60] sm:$0xf]
        %v300 = vld [vmem:[#allocation5 + $0x64] sm:$0xf]
        %v301 = vld [vmem:[#allocation5 + $0x68] sm:$0xf]
        %v302 = vld [vmem:[#allocation5 + $0x6c] sm:$0xf]
        %v303 = vld [vmem:[#allocation5 + $0x70] sm:$0xf]
        %v304 = vld [vmem:[#allocation5 + $0x74] sm:$0xf]
        %v305 = vld [vmem:[#allocation5 + $0x78] sm:$0xf]
        %v306 = vld [vmem:[#allocation5 + $0x7c] sm:$0xf]
        %v307 = vld [vmem:[#allocation5 + $0x80] sm:$0xf]
        %v308 = vld [vmem:[#allocation5 + $0x84] sm:$0xf]
        %v309 = vld [vmem:[#allocation5 + $0x88] sm:$0xf]
        %v310 = vld [vmem:[#allocation5 + $0x8c] sm:$0xf]
        %v311 = vld [vmem:[#allocation5 + $0x90] sm:$0xf]
        %v312 = vld [vmem:[#allocation5 + $0x94] sm:$0xf]
        %v313 = vld [vmem:[#allocation5 + $0x98] sm:$0xf]
        %v314 = vld [vmem:[#allocation5 + $0x9c] sm:$0xf]
        %v315 = vld [vmem:[#allocation5 + $0xa0] sm:$0xf]
        %v316 = vld [vmem:[#allocation5 + $0xa4] sm:$0xf]
        %v317 = vld [vmem:[#allocation5 + $0xa8] sm:$0xf]
        %v318 = vld [vmem:[#allocation5 + $0xac] sm:$0xf]
        %v319 = vld [vmem:[#allocation5 + $0xb0] sm:$0xf]
        %v320 = vld [vmem:[#allocation5 + $0xb4] sm:$0xf]
        %v321 = vld [vmem:[#allocation5 + $0xb8] sm:$0xf]
        %v322 = vld [vmem:[#allocation5 + $0xbc] sm:$0xf]
        %s323 = scalar_lea.vmem %s208, 24 [#allocation2]
        %v324 = vld [vmem:[%s323] sm:$0xff]
        %v325 = vld [vmem:[%s323 + $0x8] sm:$0xf]
        %v326 = vld [vmem:[%s323 + $0xc] sm:$0xff]
        %v327 = vld [vmem:[%s323 + $0x14] sm:$0xf]
        %v328 = vld [vmem:[%s323 + $0x18] sm:$0xff]
        %v329 = vld [vmem:[%s323 + $0x20] sm:$0xf]
        %v330 = vld [vmem:[%s323 + $0x24] sm:$0xff]
        %v331 = vld [vmem:[%s323 + $0x2c] sm:$0xf]
        %v332 = vld [vmem:[%s323 + $0x30] sm:$0xff]
        %v333 = vld [vmem:[%s323 + $0x38] sm:$0xf]
        %v334 = vld [vmem:[%s323 + $0x3c] sm:$0xff]
        %v335 = vld [vmem:[%s323 + $0x44] sm:$0xf]
        %v336 = vld [vmem:[%s323 + $0x48] sm:$0xff]
        %v337 = vld [vmem:[%s323 + $0x50] sm:$0xf]
        %v338 = vld [vmem:[%s323 + $0x54] sm:$0xff]
        %v339 = vld [vmem:[%s323 + $0x5c] sm:$0xf]
        %v340 = vld [vmem:[%s323 + $0x60] sm:$0xff]
        %v341 = vld [vmem:[%s323 + $0x68] sm:$0xf]
        %v342 = vld [vmem:[%s323 + $0x6c] sm:$0xff]
        %v343 = vld [vmem:[%s323 + $0x74] sm:$0xf]
        %v344 = vld [vmem:[%s323 + $0x78] sm:$0xff]
        %v345 = vld [vmem:[%s323 + $0x80] sm:$0xf]
        %v346 = vld [vmem:[%s323 + $0x84] sm:$0xff]
        %v347 = vld [vmem:[%s323 + $0x8c] sm:$0xf]
        %v348 = vld [vmem:[%s323 + $0x90] sm:$0xff]
        %v349 = vld [vmem:[%s323 + $0x98] sm:$0xf]
        %v350 = vld [vmem:[%s323 + $0x9c] sm:$0xff]
        %v351 = vld [vmem:[%s323 + $0xa4] sm:$0xf]
        %v352 = vld [vmem:[%s323 + $0xa8] sm:$0xff]
        %v353 = vld [vmem:[%s323 + $0xb0] sm:$0xf]
        %v354 = vld [vmem:[%s323 + $0xb4] sm:$0xff]
        %v355 = vld [vmem:[%s323 + $0xbc] sm:$0xf]
        %s356 = scalar_lea.vmem [#allocation5], 192
        %v357 = vld [vmem:[%s356] sm:$0xf]
        %v358 = vld [vmem:[%s356 + $0x4] sm:$0xf]
        %v359 = vld [vmem:[%s356 + $0x8] sm:$0xf]
        %v360 = vld [vmem:[%s356 + $0xc] sm:$0xf]
        %v361 = vld [vmem:[%s356 + $0x10] sm:$0xf]
        %v362 = vld [vmem:[%s356 + $0x14] sm:$0xf]
        %v363 = vld [vmem:[%s356 + $0x18] sm:$0xf]
        %v364 = vld [vmem:[%s356 + $0x1c] sm:$0xf]
        %v365 = vld [vmem:[%s356 + $0x20] sm:$0xf]
        %v366 = vld [vmem:[%s356 + $0x24] sm:$0xf]
        %v367 = vld [vmem:[%s356 + $0x28] sm:$0xf]
        %v368 = vld [vmem:[%s356 + $0x2c] sm:$0xf]
        %v369 = vld [vmem:[%s356 + $0x30] sm:$0xf]
        %v370 = vld [vmem:[%s356 + $0x34] sm:$0xf]
        %v371 = vld [vmem:[%s356 + $0x38] sm:$0xf]
        %v372 = vld [vmem:[%s356 + $0x3c] sm:$0xf]
        %v373 = vld [vmem:[%s356 + $0x40] sm:$0xf]
        %v374 = vld [vmem:[%s356 + $0x44] sm:$0xf]
        %v375 = vld [vmem:[%s356 + $0x48] sm:$0xf]
        %v376 = vld [vmem:[%s356 + $0x4c] sm:$0xf]
        %v377 = vld [vmem:[%s356 + $0x50] sm:$0xf]
        %v378 = vld [vmem:[%s356 + $0x54] sm:$0xf]
        %v379 = vld [vmem:[%s356 + $0x58] sm:$0xf]
        %v380 = vld [vmem:[%s356 + $0x5c] sm:$0xf]
        %v381 = vld [vmem:[%s356 + $0x60] sm:$0xf]
        %v382 = vld [vmem:[%s356 + $0x64] sm:$0xf]
        %v383 = vld [vmem:[%s356 + $0x68] sm:$0xf]
        %v384 = vld [vmem:[%s356 + $0x6c] sm:$0xf]
        %v385 = vld [vmem:[%s356 + $0x70] sm:$0xf]
        %v386 = vld [vmem:[%s356 + $0x74] sm:$0xf]
        %v387 = vld [vmem:[%s356 + $0x78] sm:$0xf]
        %v388 = vld [vmem:[%s356 + $0x7c] sm:$0xf]
        %v389 = vld [vmem:[%s356 + $0x80] sm:$0xf]
        %v390 = vld [vmem:[%s356 + $0x84] sm:$0xf]
        %v391 = vld [vmem:[%s356 + $0x88] sm:$0xf]
        %v392 = vld [vmem:[%s356 + $0x8c] sm:$0xf]
        %v393 = vld [vmem:[%s356 + $0x90] sm:$0xf]
        %v394 = vld [vmem:[%s356 + $0x94] sm:$0xf]
        %v395 = vld [vmem:[%s356 + $0x98] sm:$0xf]
        %v396 = vld [vmem:[%s356 + $0x9c] sm:$0xf]
        %v397 = vld [vmem:[%s356 + $0xa0] sm:$0xf]
        %v398 = vld [vmem:[%s356 + $0xa4] sm:$0xf]
        %v399 = vld [vmem:[%s356 + $0xa8] sm:$0xf]
        %v400 = vld [vmem:[%s356 + $0xac] sm:$0xf]
        %v401 = vld [vmem:[%s356 + $0xb0] sm:$0xf]
        %v402 = vld [vmem:[%s356 + $0xb4] sm:$0xf]
        %v403 = vld [vmem:[%s356 + $0xb8] sm:$0xf]
        %v404 = vld [vmem:[%s356 + $0xbc] sm:$0xf]
        %v437 = vunpack.c.l.b16 %v324
        %v438 = vunpack.c.h.b16 %v324
        %v439 = vunpack.c.l.b16 %v325
        %v440 = vunpack.c.l.b16 %v326
        %v441 = vunpack.c.h.b16 %v326
        %v442 = vunpack.c.l.b16 %v327
        %v443 = vunpack.c.l.b16 %v328
        %v444 = vunpack.c.h.b16 %v328
        %v445 = vunpack.c.l.b16 %v329
        %v446 = vunpack.c.l.b16 %v330
        %v447 = vunpack.c.h.b16 %v330
        %v448 = vunpack.c.l.b16 %v331
        %v449 = vunpack.c.l.b16 %v332
        %v450 = vunpack.c.h.b16 %v332
        %v451 = vunpack.c.l.b16 %v333
        %v452 = vunpack.c.l.b16 %v334
        %v453 = vunpack.c.h.b16 %v334
        %v454 = vunpack.c.l.b16 %v335
        %v455 = vunpack.c.l.b16 %v336
        %v456 = vunpack.c.h.b16 %v336
        %v457 = vunpack.c.l.b16 %v337
        %v458 = vunpack.c.l.b16 %v338
        %v459 = vunpack.c.h.b16 %v338
        %v460 = vunpack.c.l.b16 %v339
        %v461 = vunpack.c.l.b16 %v340
        %v462 = vunpack.c.h.b16 %v340
        %v463 = vunpack.c.l.b16 %v341
        %v464 = vunpack.c.l.b16 %v342
        %v465 = vunpack.c.h.b16 %v342
        %v466 = vunpack.c.l.b16 %v343
        %v467 = vunpack.c.l.b16 %v344
        %v468 = vunpack.c.h.b16 %v344
        %v469 = vunpack.c.l.b16 %v345
        %v470 = vunpack.c.l.b16 %v346
        %v471 = vunpack.c.h.b16 %v346
        %v472 = vunpack.c.l.b16 %v347
        %v473 = vunpack.c.l.b16 %v348
        %v474 = vunpack.c.h.b16 %v348
        %v475 = vunpack.c.l.b16 %v349
        %v476 = vunpack.c.l.b16 %v350
        %v477 = vunpack.c.h.b16 %v350
        %v478 = vunpack.c.l.b16 %v351
        %v479 = vunpack.c.l.b16 %v352
        %v480 = vunpack.c.h.b16 %v352
        %v481 = vunpack.c.l.b16 %v353
        %v482 = vunpack.c.l.b16 %v354
        %v483 = vunpack.c.h.b16 %v354
        %v484 = vunpack.c.l.b16 %v355
        %v485 = vpack.c.b16 %v440, %v437
        %v486 = vpack.c.b16 %v441, %v438
        %v487 = vpack.c.b16 %v442, %v439
        %v488 = vpack.c.b16 %v446, %v443
        %v489 = vpack.c.b16 %v447, %v444
        %v490 = vpack.c.b16 %v448, %v445
        %v491 = vpack.c.b16 %v452, %v449
        %v492 = vpack.c.b16 %v453, %v450
        %v493 = vpack.c.b16 %v454, %v451
        %v494 = vpack.c.b16 %v458, %v455
        %v495 = vpack.c.b16 %v459, %v456
        %v496 = vpack.c.b16 %v460, %v457
        %v497 = vpack.c.b16 %v464, %v461
        %v498 = vpack.c.b16 %v465, %v462
        %v499 = vpack.c.b16 %v466, %v463
        %v500 = vpack.c.b16 %v470, %v467
        %v501 = vpack.c.b16 %v471, %v468
        %v502 = vpack.c.b16 %v472, %v469
        %v503 = vpack.c.b16 %v476, %v473
        %v504 = vpack.c.b16 %v477, %v474
        %v505 = vpack.c.b16 %v478, %v475
        %v506 = vpack.c.b16 %v482, %v479
        %v507 = vpack.c.b16 %v483, %v480
        %v508 = vpack.c.b16 %v484, %v481
        %v581 = vunpack.c.l.b16 %v357
        %v582 = vunpack.c.l.b16 %v358
        %v583 = vunpack.c.l.b16 %v359
        %v584 = vunpack.c.l.b16 %v360
        %v585 = vunpack.c.l.b16 %v361
        %v586 = vunpack.c.l.b16 %v362
        %v587 = vunpack.c.l.b16 %v363
        %v588 = vunpack.c.l.b16 %v364
        %v589 = vunpack.c.l.b16 %v365
        %v590 = vunpack.c.l.b16 %v366
        %v591 = vunpack.c.l.b16 %v367
        %v592 = vunpack.c.l.b16 %v368
        %v593 = vunpack.c.l.b16 %v369
        %v594 = vunpack.c.l.b16 %v370
        %v595 = vunpack.c.l.b16 %v371
        %v596 = vunpack.c.l.b16 %v372
        %v597 = vunpack.c.l.b16 %v373
        %v598 = vunpack.c.l.b16 %v374
        %v599 = vunpack.c.l.b16 %v375
        %v600 = vunpack.c.l.b16 %v376
        %v601 = vunpack.c.l.b16 %v377
        %v602 = vunpack.c.l.b16 %v378
        %v603 = vunpack.c.l.b16 %v379
        %v604 = vunpack.c.l.b16 %v380
        %v605 = vunpack.c.l.b16 %v381
        %v606 = vunpack.c.l.b16 %v382
        %v607 = vunpack.c.l.b16 %v383
        %v608 = vunpack.c.l.b16 %v384
        %v609 = vunpack.c.l.b16 %v385
        %v610 = vunpack.c.l.b16 %v386
        %v611 = vunpack.c.l.b16 %v387
        %v612 = vunpack.c.l.b16 %v388
        %v613 = vunpack.c.l.b16 %v389
        %v614 = vunpack.c.l.b16 %v390
        %v615 = vunpack.c.l.b16 %v391
        %v616 = vunpack.c.l.b16 %v392
        %v617 = vunpack.c.l.b16 %v393
        %v618 = vunpack.c.l.b16 %v394
        %v619 = vunpack.c.l.b16 %v395
        %v620 = vunpack.c.l.b16 %v396
        %v621 = vunpack.c.l.b16 %v397
        %v622 = vunpack.c.l.b16 %v398
        %v623 = vunpack.c.l.b16 %v399
        %v624 = vunpack.c.l.b16 %v400
        %v625 = vunpack.c.l.b16 %v401
        %v626 = vunpack.c.l.b16 %v402
        %v627 = vunpack.c.l.b16 %v403
        %v628 = vunpack.c.l.b16 %v404
        %v629 = vpack.c.b16 %v582, %v581
        %v630 = vpack.c.b16 %v584, %v583
        %v631 = vpack.c.b16 %v586, %v585
        %v632 = vpack.c.b16 %v588, %v587
        %v633 = vpack.c.b16 %v590, %v589
        %v634 = vpack.c.b16 %v592, %v591
        %v635 = vpack.c.b16 %v594, %v593
        %v636 = vpack.c.b16 %v596, %v595
        %v637 = vpack.c.b16 %v598, %v597
        %v638 = vpack.c.b16 %v600, %v599
        %v639 = vpack.c.b16 %v602, %v601
        %v640 = vpack.c.b16 %v604, %v603
        %v641 = vpack.c.b16 %v606, %v605
        %v642 = vpack.c.b16 %v608, %v607
        %v643 = vpack.c.b16 %v610, %v609
        %v644 = vpack.c.b16 %v612, %v611
        %v645 = vpack.c.b16 %v614, %v613
        %v646 = vpack.c.b16 %v616, %v615
        %v647 = vpack.c.b16 %v618, %v617
        %v648 = vpack.c.b16 %v620, %v619
        %v649 = vpack.c.b16 %v622, %v621
        %v650 = vpack.c.b16 %v624, %v623
        %v651 = vpack.c.b16 %v626, %v625
        %v652 = vpack.c.b16 %v628, %v627
        %677 = vmatpush.bf16.msra.mxu0 %v636
        %678 = vmatpush.bf16.msra.mxu0 %v635
        %679 = vmatpush.bf16.msra.mxu0 %v634
        %680 = vmatpush.bf16.msra.mxu0 %v633
        %681 = vmatpush.bf16.msra.mxu0 %v632
        %682 = vmatpush.bf16.msra.mxu0 %v631
        %683 = vmatpush.bf16.msra.mxu0 %v630
        %684 = vmatpush.bf16.msra.mxu0 %v629
        %685 = vmatmul.bf16.gmra.mxu0 %v485
        %v686 = vpop.f32.mrf.mxu0
        %v687 = vadd.f32 0.0, %v686
        %v688 = vpop.f32.mrf.mxu0
        %v689 = vadd.f32 0.0, %v688
        %690 = vmatmul.bf16.gmra.mxu0 %v488
        %v691 = vpop.f32.mrf.mxu0
        %v692 = vadd.f32 0.0, %v691
        %v693 = vpop.f32.mrf.mxu0
        %v694 = vadd.f32 0.0, %v693
        %695 = vmatmul.bf16.gmra.mxu0 %v491
        %v696 = vpop.f32.mrf.mxu0
        %v697 = vadd.f32 0.0, %v696
        %v698 = vpop.f32.mrf.mxu0
        %v699 = vadd.f32 0.0, %v698
        %700 = vmatmul.bf16.gmra.mxu0 %v494
        %v701 = vpop.f32.mrf.mxu0
        %v702 = vadd.f32 0.0, %v701
        %v703 = vpop.f32.mrf.mxu0
        %v704 = vadd.f32 0.0, %v703
        %705 = vmatmul.bf16.gmra.mxu0 %v497
        %v706 = vpop.f32.mrf.mxu0
        %v707 = vadd.f32 0.0, %v706
        %v708 = vpop.f32.mrf.mxu0
        %v709 = vadd.f32 0.0, %v708
        %710 = vmatmul.bf16.gmra.mxu0 %v500
        %v711 = vpop.f32.mrf.mxu0
        %v712 = vadd.f32 0.0, %v711
        %v713 = vpop.f32.mrf.mxu0
        %v714 = vadd.f32 0.0, %v713
        %715 = vmatmul.bf16.gmra.mxu0 %v503
        %v716 = vpop.f32.mrf.mxu0
        %v717 = vadd.f32 0.0, %v716
        %v718 = vpop.f32.mrf.mxu0
        %v719 = vadd.f32 0.0, %v718
        %720 = vmatmul.bf16.gmra.mxu0 %v506
        %v721 = vpop.f32.mrf.mxu0
        %v722 = vadd.f32 0.0, %v721
        %v723 = vpop.f32.mrf.mxu0
        %v724 = vadd.f32 0.0, %v723
        %725 = vdwg.mxu0
        %726 = vmatpush.bf16.msra.mxu0 %v644
        %727 = vmatpush.bf16.msra.mxu0 %v643
        %728 = vmatpush.bf16.msra.mxu0 %v642
        %729 = vmatpush.bf16.msra.mxu0 %v641
        %730 = vmatpush.bf16.msra.mxu0 %v640
        %731 = vmatpush.bf16.msra.mxu0 %v639
        %732 = vmatpush.bf16.msra.mxu0 %v638
        %733 = vmatpush.bf16.msra.mxu0 %v637
        %734 = vmatmul.bf16.gmra.mxu0 %v486
        %v735 = vpop.f32.mrf.mxu0
        %v736 = vadd.f32 %v687, %v735
        %v737 = vpop.f32.mrf.mxu0
        %v738 = vadd.f32 %v689, %v737
        %739 = vmatmul.bf16.gmra.mxu0 %v489
        %v740 = vpop.f32.mrf.mxu0
        %v741 = vadd.f32 %v692, %v740
        %v742 = vpop.f32.mrf.mxu0
        %v743 = vadd.f32 %v694, %v742
        %744 = vmatmul.bf16.gmra.mxu0 %v492
        %v745 = vpop.f32.mrf.mxu0
        %v746 = vadd.f32 %v697, %v745
        %v747 = vpop.f32.mrf.mxu0
        %v748 = vadd.f32 %v699, %v747
        %749 = vmatmul.bf16.gmra.mxu0 %v495
        %v750 = vpop.f32.mrf.mxu0
        %v751 = vadd.f32 %v702, %v750
        %v752 = vpop.f32.mrf.mxu0
        %v753 = vadd.f32 %v704, %v752
        %754 = vmatmul.bf16.gmra.mxu0 %v498
        %v755 = vpop.f32.mrf.mxu0
        %v756 = vadd.f32 %v707, %v755
        %v757 = vpop.f32.mrf.mxu0
        %v758 = vadd.f32 %v709, %v757
        %759 = vmatmul.bf16.gmra.mxu0 %v501
        %v760 = vpop.f32.mrf.mxu0
        %v761 = vadd.f32 %v712, %v760
        %v762 = vpop.f32.mrf.mxu0
        %v763 = vadd.f32 %v714, %v762
        %764 = vmatmul.bf16.gmra.mxu0 %v504
        %v765 = vpop.f32.mrf.mxu0
        %v766 = vadd.f32 %v717, %v765
        %v767 = vpop.f32.mrf.mxu0
        %v768 = vadd.f32 %v719, %v767
        %769 = vmatmul.bf16.gmra.mxu0 %v507
        %v770 = vpop.f32.mrf.mxu0
        %v771 = vadd.f32 %v722, %v770
        %v772 = vpop.f32.mrf.mxu0
        %v773 = vadd.f32 %v724, %v772
        %774 = vdwg.mxu0
        %775 = vmatpush.bf16.msra.mxu0 %v652
        %776 = vmatpush.bf16.msra.mxu0 %v651
        %777 = vmatpush.bf16.msra.mxu0 %v650
        %778 = vmatpush.bf16.msra.mxu0 %v649
        %779 = vmatpush.bf16.msra.mxu0 %v648
        %780 = vmatpush.bf16.msra.mxu0 %v647
        %781 = vmatpush.bf16.msra.mxu0 %v646
        %782 = vmatpush.bf16.msra.mxu0 %v645
        %783 = vmatmul.bf16.gmra.mxu0 %v487
        %v784 = vpop.f32.mrf.mxu0
        %v785 = vadd.f32 %v736, %v784
        %v786 = vpop.f32.mrf.mxu0
        %v787 = vadd.f32 %v738, %v786
        %788 = vmatmul.bf16.gmra.mxu0 %v490
        %v789 = vpop.f32.mrf.mxu0
        %v790 = vadd.f32 %v741, %v789
        %v791 = vpop.f32.mrf.mxu0
        %v792 = vadd.f32 %v743, %v791
        %793 = vmatmul.bf16.gmra.mxu0 %v493
        %v794 = vpop.f32.mrf.mxu0
        %v795 = vadd.f32 %v746, %v794
        %v796 = vpop.f32.mrf.mxu0
        %v797 = vadd.f32 %v748, %v796
        %798 = vmatmul.bf16.gmra.mxu0 %v496
        %v799 = vpop.f32.mrf.mxu0
        %v800 = vadd.f32 %v751, %v799
        %v801 = vpop.f32.mrf.mxu0
        %v802 = vadd.f32 %v753, %v801
        %803 = vmatmul.bf16.gmra.mxu0 %v499
        %v804 = vpop.f32.mrf.mxu0
        %v805 = vadd.f32 %v756, %v804
        %v806 = vpop.f32.mrf.mxu0
        %v807 = vadd.f32 %v758, %v806
        %808 = vmatmul.bf16.gmra.mxu0 %v502
        %v809 = vpop.f32.mrf.mxu0
        %v810 = vadd.f32 %v761, %v809
        %v811 = vpop.f32.mrf.mxu0
        %v812 = vadd.f32 %v763, %v811
        %813 = vmatmul.bf16.gmra.mxu0 %v505
        %v814 = vpop.f32.mrf.mxu0
        %v815 = vadd.f32 %v766, %v814
        %v816 = vpop.f32.mrf.mxu0
        %v817 = vadd.f32 %v768, %v816
        %818 = vmatmul.bf16.gmra.mxu0 %v508
        %v819 = vpop.f32.mrf.mxu0
        %v820 = vadd.f32 %v771, %v819
        %v821 = vpop.f32.mrf.mxu0
        %v822 = vadd.f32 %v773, %v821
        %823 = vdwg.mxu0
        %v856 = vunpack.c.l.b16 %v243
        %v857 = vunpack.c.h.b16 %v243
        %v858 = vunpack.c.l.b16 %v244
        %v859 = vunpack.c.l.b16 %v245
        %v860 = vunpack.c.h.b16 %v245
        %v861 = vunpack.c.l.b16 %v246
        %v862 = vunpack.c.l.b16 %v247
        %v863 = vunpack.c.h.b16 %v247
        %v864 = vunpack.c.l.b16 %v248
        %v865 = vunpack.c.l.b16 %v249
        %v866 = vunpack.c.h.b16 %v249
        %v867 = vunpack.c.l.b16 %v250
        %v868 = vunpack.c.l.b16 %v251
        %v869 = vunpack.c.h.b16 %v251
        %v870 = vunpack.c.l.b16 %v252
        %v871 = vunpack.c.l.b16 %v253
        %v872 = vunpack.c.h.b16 %v253
        %v873 = vunpack.c.l.b16 %v254
        %v874 = vunpack.c.l.b16 %v255
        %v875 = vunpack.c.h.b16 %v255
        %v876 = vunpack.c.l.b16 %v256
        %v877 = vunpack.c.l.b16 %v257
        %v878 = vunpack.c.h.b16 %v257
        %v879 = vunpack.c.l.b16 %v258
        %v880 = vunpack.c.l.b16 %v259
        %v881 = vunpack.c.h.b16 %v259
        %v882 = vunpack.c.l.b16 %v260
        %v883 = vunpack.c.l.b16 %v261
        %v884 = vunpack.c.h.b16 %v261
        %v885 = vunpack.c.l.b16 %v262
        %v886 = vunpack.c.l.b16 %v263
        %v887 = vunpack.c.h.b16 %v263
        %v888 = vunpack.c.l.b16 %v264
        %v889 = vunpack.c.l.b16 %v265
        %v890 = vunpack.c.h.b16 %v265
        %v891 = vunpack.c.l.b16 %v266
        %v892 = vunpack.c.l.b16 %v267
        %v893 = vunpack.c.h.b16 %v267
        %v894 = vunpack.c.l.b16 %v268
        %v895 = vunpack.c.l.b16 %v269
        %v896 = vunpack.c.h.b16 %v269
        %v897 = vunpack.c.l.b16 %v270
        %v898 = vunpack.c.l.b16 %v271
        %v899 = vunpack.c.h.b16 %v271
        %v900 = vunpack.c.l.b16 %v272
        %v901 = vunpack.c.l.b16 %v273
        %v902 = vunpack.c.h.b16 %v273
        %v903 = vunpack.c.l.b16 %v274
        %v904 = vpack.c.b16 %v859, %v856
        %v905 = vpack.c.b16 %v860, %v857
        %v906 = vpack.c.b16 %v861, %v858
        %v907 = vpack.c.b16 %v865, %v862
        %v908 = vpack.c.b16 %v866, %v863
        %v909 = vpack.c.b16 %v867, %v864
        %v910 = vpack.c.b16 %v871, %v868
        %v911 = vpack.c.b16 %v872, %v869
        %v912 = vpack.c.b16 %v873, %v870
        %v913 = vpack.c.b16 %v877, %v874
        %v914 = vpack.c.b16 %v878, %v875
        %v915 = vpack.c.b16 %v879, %v876
        %v916 = vpack.c.b16 %v883, %v880
        %v917 = vpack.c.b16 %v884, %v881
        %v918 = vpack.c.b16 %v885, %v882
        %v919 = vpack.c.b16 %v889, %v886
        %v920 = vpack.c.b16 %v890, %v887
        %v921 = vpack.c.b16 %v891, %v888
        %v922 = vpack.c.b16 %v895, %v892
        %v923 = vpack.c.b16 %v896, %v893
        %v924 = vpack.c.b16 %v897, %v894
        %v925 = vpack.c.b16 %v901, %v898
        %v926 = vpack.c.b16 %v902, %v899
        %v927 = vpack.c.b16 %v903, %v900
        %v1000 = vunpack.c.l.b16 %v275
        %v1001 = vunpack.c.l.b16 %v276
        %v1002 = vunpack.c.l.b16 %v277
        %v1003 = vunpack.c.l.b16 %v278
        %v1004 = vunpack.c.l.b16 %v279
        %v1005 = vunpack.c.l.b16 %v280
        %v1006 = vunpack.c.l.b16 %v281
        %v1007 = vunpack.c.l.b16 %v282
        %v1008 = vunpack.c.l.b16 %v283
        %v1009 = vunpack.c.l.b16 %v284
        %v1010 = vunpack.c.l.b16 %v285
        %v1011 = vunpack.c.l.b16 %v286
        %v1012 = vunpack.c.l.b16 %v287
        %v1013 = vunpack.c.l.b16 %v288
        %v1014 = vunpack.c.l.b16 %v289
        %v1015 = vunpack.c.l.b16 %v290
        %v1016 = vunpack.c.l.b16 %v291
        %v1017 = vunpack.c.l.b16 %v292
        %v1018 = vunpack.c.l.b16 %v293
        %v1019 = vunpack.c.l.b16 %v294
        %v1020 = vunpack.c.l.b16 %v295
        %v1021 = vunpack.c.l.b16 %v296
        %v1022 = vunpack.c.l.b16 %v297
        %v1023 = vunpack.c.l.b16 %v298
        %v1024 = vunpack.c.l.b16 %v299
        %v1025 = vunpack.c.l.b16 %v300
        %v1026 = vunpack.c.l.b16 %v301
        %v1027 = vunpack.c.l.b16 %v302
        %v1028 = vunpack.c.l.b16 %v303
        %v1029 = vunpack.c.l.b16 %v304
        %v1030 = vunpack.c.l.b16 %v305
        %v1031 = vunpack.c.l.b16 %v306
        %v1032 = vunpack.c.l.b16 %v307
        %v1033 = vunpack.c.l.b16 %v308
        %v1034 = vunpack.c.l.b16 %v309
        %v1035 = vunpack.c.l.b16 %v310
        %v1036 = vunpack.c.l.b16 %v311
        %v1037 = vunpack.c.l.b16 %v312
        %v1038 = vunpack.c.l.b16 %v313
        %v1039 = vunpack.c.l.b16 %v314
        %v1040 = vunpack.c.l.b16 %v315
        %v1041 = vunpack.c.l.b16 %v316
        %v1042 = vunpack.c.l.b16 %v317
        %v1043 = vunpack.c.l.b16 %v318
        %v1044 = vunpack.c.l.b16 %v319
        %v1045 = vunpack.c.l.b16 %v320
        %v1046 = vunpack.c.l.b16 %v321
        %v1047 = vunpack.c.l.b16 %v322
        %v1048 = vpack.c.b16 %v1001, %v1000
        %v1049 = vpack.c.b16 %v1003, %v1002
        %v1050 = vpack.c.b16 %v1005, %v1004
        %v1051 = vpack.c.b16 %v1007, %v1006
        %v1052 = vpack.c.b16 %v1009, %v1008
        %v1053 = vpack.c.b16 %v1011, %v1010
        %v1054 = vpack.c.b16 %v1013, %v1012
        %v1055 = vpack.c.b16 %v1015, %v1014
        %v1056 = vpack.c.b16 %v1017, %v1016
        %v1057 = vpack.c.b16 %v1019, %v1018
        %v1058 = vpack.c.b16 %v1021, %v1020
        %v1059 = vpack.c.b16 %v1023, %v1022
        %v1060 = vpack.c.b16 %v1025, %v1024
        %v1061 = vpack.c.b16 %v1027, %v1026
        %v1062 = vpack.c.b16 %v1029, %v1028
        %v1063 = vpack.c.b16 %v1031, %v1030
        %v1064 = vpack.c.b16 %v1033, %v1032
        %v1065 = vpack.c.b16 %v1035, %v1034
        %v1066 = vpack.c.b16 %v1037, %v1036
        %v1067 = vpack.c.b16 %v1039, %v1038
        %v1068 = vpack.c.b16 %v1041, %v1040
        %v1069 = vpack.c.b16 %v1043, %v1042
        %v1070 = vpack.c.b16 %v1045, %v1044
        %v1071 = vpack.c.b16 %v1047, %v1046
        %1096 = vmatpush.bf16.msra.mxu0 %v1055
        %1097 = vmatpush.bf16.msra.mxu0 %v1054
        %1098 = vmatpush.bf16.msra.mxu0 %v1053
        %1099 = vmatpush.bf16.msra.mxu0 %v1052
        %1100 = vmatpush.bf16.msra.mxu0 %v1051
        %1101 = vmatpush.bf16.msra.mxu0 %v1050
        %1102 = vmatpush.bf16.msra.mxu0 %v1049
        %1103 = vmatpush.bf16.msra.mxu0 %v1048
        %1104 = vmatmul.bf16.gmra.mxu0 %v904
        %v1105 = vpop.f32.mrf.mxu0
        %v1106 = vadd.f32 %v785, %v1105
        %v1107 = vpop.f32.mrf.mxu0
        %v1108 = vadd.f32 %v787, %v1107
        %1109 = vmatmul.bf16.gmra.mxu0 %v907
        %v1110 = vpop.f32.mrf.mxu0
        %v1111 = vadd.f32 %v790, %v1110
        %v1112 = vpop.f32.mrf.mxu0
        %v1113 = vadd.f32 %v792, %v1112
        %1114 = vmatmul.bf16.gmra.mxu0 %v910
        %v1115 = vpop.f32.mrf.mxu0
        %v1116 = vadd.f32 %v795, %v1115
        %v1117 = vpop.f32.mrf.mxu0
        %v1118 = vadd.f32 %v797, %v1117
        %1119 = vmatmul.bf16.gmra.mxu0 %v913
        %v1120 = vpop.f32.mrf.mxu0
        %v1121 = vadd.f32 %v800, %v1120
        %v1122 = vpop.f32.mrf.mxu0
        %v1123 = vadd.f32 %v802, %v1122
        %1124 = vmatmul.bf16.gmra.mxu0 %v916
        %v1125 = vpop.f32.mrf.mxu0
        %v1126 = vadd.f32 %v805, %v1125
        %v1127 = vpop.f32.mrf.mxu0
        %v1128 = vadd.f32 %v807, %v1127
        %1129 = vmatmul.bf16.gmra.mxu0 %v919
        %v1130 = vpop.f32.mrf.mxu0
        %v1131 = vadd.f32 %v810, %v1130
        %v1132 = vpop.f32.mrf.mxu0
        %v1133 = vadd.f32 %v812, %v1132
        %1134 = vmatmul.bf16.gmra.mxu0 %v922
        %v1135 = vpop.f32.mrf.mxu0
        %v1136 = vadd.f32 %v815, %v1135
        %v1137 = vpop.f32.mrf.mxu0
        %v1138 = vadd.f32 %v817, %v1137
        %1139 = vmatmul.bf16.gmra.mxu0 %v925
        %v1140 = vpop.f32.mrf.mxu0
        %v1141 = vadd.f32 %v820, %v1140
        %v1142 = vpop.f32.mrf.mxu0
        %v1143 = vadd.f32 %v822, %v1142
        %1144 = vdwg.mxu0
        %1145 = vmatpush.bf16.msra.mxu0 %v1063
        %1146 = vmatpush.bf16.msra.mxu0 %v1062
        %1147 = vmatpush.bf16.msra.mxu0 %v1061
        %1148 = vmatpush.bf16.msra.mxu0 %v1060
        %1149 = vmatpush.bf16.msra.mxu0 %v1059
        %1150 = vmatpush.bf16.msra.mxu0 %v1058
        %1151 = vmatpush.bf16.msra.mxu0 %v1057
        %1152 = vmatpush.bf16.msra.mxu0 %v1056
        %1153 = vmatmul.bf16.gmra.mxu0 %v905
        %v1154 = vpop.f32.mrf.mxu0
        %v1155 = vadd.f32 %v1106, %v1154
        %v1156 = vpop.f32.mrf.mxu0
        %v1157 = vadd.f32 %v1108, %v1156
        %1158 = vmatmul.bf16.gmra.mxu0 %v908
        %v1159 = vpop.f32.mrf.mxu0
        %v1160 = vadd.f32 %v1111, %v1159
        %v1161 = vpop.f32.mrf.mxu0
        %v1162 = vadd.f32 %v1113, %v1161
        %1163 = vmatmul.bf16.gmra.mxu0 %v911
        %v1164 = vpop.f32.mrf.mxu0
        %v1165 = vadd.f32 %v1116, %v1164
        %v1166 = vpop.f32.mrf.mxu0
        %v1167 = vadd.f32 %v1118, %v1166
        %1168 = vmatmul.bf16.gmra.mxu0 %v914
        %v1169 = vpop.f32.mrf.mxu0
        %v1170 = vadd.f32 %v1121, %v1169
        %v1171 = vpop.f32.mrf.mxu0
        %v1172 = vadd.f32 %v1123, %v1171
        %1173 = vmatmul.bf16.gmra.mxu0 %v917
        %v1174 = vpop.f32.mrf.mxu0
        %v1175 = vadd.f32 %v1126, %v1174
        %v1176 = vpop.f32.mrf.mxu0
        %v1177 = vadd.f32 %v1128, %v1176
        %1178 = vmatmul.bf16.gmra.mxu0 %v920
        %v1179 = vpop.f32.mrf.mxu0
        %v1180 = vadd.f32 %v1131, %v1179
        %v1181 = vpop.f32.mrf.mxu0
        %v1182 = vadd.f32 %v1133, %v1181
        %1183 = vmatmul.bf16.gmra.mxu0 %v923
        %v1184 = vpop.f32.mrf.mxu0
        %v1185 = vadd.f32 %v1136, %v1184
        %v1186 = vpop.f32.mrf.mxu0
        %v1187 = vadd.f32 %v1138, %v1186
        %1188 = vmatmul.bf16.gmra.mxu0 %v926
        %v1189 = vpop.f32.mrf.mxu0
        %v1190 = vadd.f32 %v1141, %v1189
        %v1191 = vpop.f32.mrf.mxu0
        %v1192 = vadd.f32 %v1143, %v1191
        %1193 = vdwg.mxu0
        %1194 = vmatpush.bf16.msra.mxu0 %v1071
        %1195 = vmatpush.bf16.msra.mxu0 %v1070
        %1196 = vmatpush.bf16.msra.mxu0 %v1069
        %1197 = vmatpush.bf16.msra.mxu0 %v1068
        %1198 = vmatpush.bf16.msra.mxu0 %v1067
        %1199 = vmatpush.bf16.msra.mxu0 %v1066
        %1200 = vmatpush.bf16.msra.mxu0 %v1065
        %1201 = vmatpush.bf16.msra.mxu0 %v1064
        %1202 = vmatmul.bf16.gmra.mxu0 %v906
        %v1203 = vpop.f32.mrf.mxu0
        %v1204 = vadd.f32 %v1155, %v1203
        %v1205 = vpop.f32.mrf.mxu0
        %v1206 = vadd.f32 %v1157, %v1205
        %1207 = vmatmul.bf16.gmra.mxu0 %v909
        %v1208 = vpop.f32.mrf.mxu0
        %v1209 = vadd.f32 %v1160, %v1208
        %v1210 = vpop.f32.mrf.mxu0
        %v1211 = vadd.f32 %v1162, %v1210
        %1212 = vmatmul.bf16.gmra.mxu0 %v912
        %v1213 = vpop.f32.mrf.mxu0
        %v1214 = vadd.f32 %v1165, %v1213
        %v1215 = vpop.f32.mrf.mxu0
        %v1216 = vadd.f32 %v1167, %v1215
        %1217 = vmatmul.bf16.gmra.mxu0 %v915
        %v1218 = vpop.f32.mrf.mxu0
        %v1219 = vadd.f32 %v1170, %v1218
        %v1220 = vpop.f32.mrf.mxu0
        %v1221 = vadd.f32 %v1172, %v1220
        %1222 = vmatmul.bf16.gmra.mxu0 %v918
        %v1223 = vpop.f32.mrf.mxu0
        %v1224 = vadd.f32 %v1175, %v1223
        %v1225 = vpop.f32.mrf.mxu0
        %v1226 = vadd.f32 %v1177, %v1225
        %1227 = vmatmul.bf16.gmra.mxu0 %v921
        %v1228 = vpop.f32.mrf.mxu0
        %v1229 = vadd.f32 %v1180, %v1228
        %v1230 = vpop.f32.mrf.mxu0
        %v1231 = vadd.f32 %v1182, %v1230
        %1232 = vmatmul.bf16.gmra.mxu0 %v924
        %v1233 = vpop.f32.mrf.mxu0
        %v1234 = vadd.f32 %v1185, %v1233
        %v1235 = vpop.f32.mrf.mxu0
        %v1236 = vadd.f32 %v1187, %v1235
        %1237 = vmatmul.bf16.gmra.mxu0 %v927
        %v1238 = vpop.f32.mrf.mxu0
        %v1239 = vadd.f32 %v1190, %v1238
        %v1240 = vpop.f32.mrf.mxu0
        %v1241 = vadd.f32 %v1192, %v1240
        %1242 = vdwg.mxu0
        %s1243 = scalar_lea.vmem %s208, 48 [#allocation2]
        %v1244 = vld [vmem:[%s1243] sm:$0xff]
        %v1245 = vld [vmem:[%s1243 + $0x8] sm:$0xf]
        %v1246 = vld [vmem:[%s1243 + $0xc] sm:$0xff]
        %v1247 = vld [vmem:[%s1243 + $0x14] sm:$0xf]
        %v1248 = vld [vmem:[%s1243 + $0x18] sm:$0xff]
        %v1249 = vld [vmem:[%s1243 + $0x20] sm:$0xf]
        %v1250 = vld [vmem:[%s1243 + $0x24] sm:$0xff]
        %v1251 = vld [vmem:[%s1243 + $0x2c] sm:$0xf]
        %v1252 = vld [vmem:[%s1243 + $0x30] sm:$0xff]
        %v1253 = vld [vmem:[%s1243 + $0x38] sm:$0xf]
        %v1254 = vld [vmem:[%s1243 + $0x3c] sm:$0xff]
        %v1255 = vld [vmem:[%s1243 + $0x44] sm:$0xf]
        %v1256 = vld [vmem:[%s1243 + $0x48] sm:$0xff]
        %v1257 = vld [vmem:[%s1243 + $0x50] sm:$0xf]
        %v1258 = vld [vmem:[%s1243 + $0x54] sm:$0xff]
        %v1259 = vld [vmem:[%s1243 + $0x5c] sm:$0xf]
        %v1260 = vld [vmem:[%s1243 + $0x60] sm:$0xff]
        %v1261 = vld [vmem:[%s1243 + $0x68] sm:$0xf]
        %v1262 = vld [vmem:[%s1243 + $0x6c] sm:$0xff]
        %v1263 = vld [vmem:[%s1243 + $0x74] sm:$0xf]
        %v1264 = vld [vmem:[%s1243 + $0x78] sm:$0xff]
        %v1265 = vld [vmem:[%s1243 + $0x80] sm:$0xf]
        %v1266 = vld [vmem:[%s1243 + $0x84] sm:$0xff]
        %v1267 = vld [vmem:[%s1243 + $0x8c] sm:$0xf]
        %v1268 = vld [vmem:[%s1243 + $0x90] sm:$0xff]
        %v1269 = vld [vmem:[%s1243 + $0x98] sm:$0xf]
        %v1270 = vld [vmem:[%s1243 + $0x9c] sm:$0xff]
        %v1271 = vld [vmem:[%s1243 + $0xa4] sm:$0xf]
        %v1272 = vld [vmem:[%s1243 + $0xa8] sm:$0xff]
        %v1273 = vld [vmem:[%s1243 + $0xb0] sm:$0xf]
        %v1274 = vld [vmem:[%s1243 + $0xb4] sm:$0xff]
        %v1275 = vld [vmem:[%s1243 + $0xbc] sm:$0xf]
        %s1276 = scalar_lea.vmem [#allocation5], 384
        %v1277 = vld [vmem:[%s1276] sm:$0xf]
        %v1278 = vld [vmem:[%s1276 + $0x4] sm:$0xf]
        %v1279 = vld [vmem:[%s1276 + $0x8] sm:$0xf]
        %v1280 = vld [vmem:[%s1276 + $0xc] sm:$0xf]
        %v1281 = vld [vmem:[%s1276 + $0x10] sm:$0xf]
        %v1282 = vld [vmem:[%s1276 + $0x14] sm:$0xf]
        %v1283 = vld [vmem:[%s1276 + $0x18] sm:$0xf]
        %v1284 = vld [vmem:[%s1276 + $0x1c] sm:$0xf]
        %v1285 = vld [vmem:[%s1276 + $0x20] sm:$0xf]
        %v1286 = vld [vmem:[%s1276 + $0x24] sm:$0xf]
        %v1287 = vld [vmem:[%s1276 + $0x28] sm:$0xf]
        %v1288 = vld [vmem:[%s1276 + $0x2c] sm:$0xf]
        %v1289 = vld [vmem:[%s1276 + $0x30] sm:$0xf]
        %v1290 = vld [vmem:[%s1276 + $0x34] sm:$0xf]
        %v1291 = vld [vmem:[%s1276 + $0x38] sm:$0xf]
        %v1292 = vld [vmem:[%s1276 + $0x3c] sm:$0xf]
        %v1293 = vld [vmem:[%s1276 + $0x40] sm:$0xf]
        %v1294 = vld [vmem:[%s1276 + $0x44] sm:$0xf]
        %v1295 = vld [vmem:[%s1276 + $0x48] sm:$0xf]
        %v1296 = vld [vmem:[%s1276 + $0x4c] sm:$0xf]
        %v1297 = vld [vmem:[%s1276 + $0x50] sm:$0xf]
        %v1298 = vld [vmem:[%s1276 + $0x54] sm:$0xf]
        %v1299 = vld [vmem:[%s1276 + $0x58] sm:$0xf]
        %v1300 = vld [vmem:[%s1276 + $0x5c] sm:$0xf]
        %v1301 = vld [vmem:[%s1276 + $0x60] sm:$0xf]
        %v1302 = vld [vmem:[%s1276 + $0x64] sm:$0xf]
        %v1303 = vld [vmem:[%s1276 + $0x68] sm:$0xf]
        %v1304 = vld [vmem:[%s1276 + $0x6c] sm:$0xf]
        %v1305 = vld [vmem:[%s1276 + $0x70] sm:$0xf]
        %v1306 = vld [vmem:[%s1276 + $0x74] sm:$0xf]
        %v1307 = vld [vmem:[%s1276 + $0x78] sm:$0xf]
        %v1308 = vld [vmem:[%s1276 + $0x7c] sm:$0xf]
        %v1309 = vld [vmem:[%s1276 + $0x80] sm:$0xf]
        %v1310 = vld [vmem:[%s1276 + $0x84] sm:$0xf]
        %v1311 = vld [vmem:[%s1276 + $0x88] sm:$0xf]
        %v1312 = vld [vmem:[%s1276 + $0x8c] sm:$0xf]
        %v1313 = vld [vmem:[%s1276 + $0x90] sm:$0xf]
        %v1314 = vld [vmem:[%s1276 + $0x94] sm:$0xf]
        %v1315 = vld [vmem:[%s1276 + $0x98] sm:$0xf]
        %v1316 = vld [vmem:[%s1276 + $0x9c] sm:$0xf]
        %v1317 = vld [vmem:[%s1276 + $0xa0] sm:$0xf]
        %v1318 = vld [vmem:[%s1276 + $0xa4] sm:$0xf]
        %v1319 = vld [vmem:[%s1276 + $0xa8] sm:$0xf]
        %v1320 = vld [vmem:[%s1276 + $0xac] sm:$0xf]
        %v1321 = vld [vmem:[%s1276 + $0xb0] sm:$0xf]
        %v1322 = vld [vmem:[%s1276 + $0xb4] sm:$0xf]
        %v1323 = vld [vmem:[%s1276 + $0xb8] sm:$0xf]
        %v1324 = vld [vmem:[%s1276 + $0xbc] sm:$0xf]
        %v1357 = vunpack.c.l.b16 %v1244
        %v1358 = vunpack.c.h.b16 %v1244
        %v1359 = vunpack.c.l.b16 %v1245
        %v1360 = vunpack.c.l.b16 %v1246
        %v1361 = vunpack.c.h.b16 %v1246
        %v1362 = vunpack.c.l.b16 %v1247
        %v1363 = vunpack.c.l.b16 %v1248
        %v1364 = vunpack.c.h.b16 %v1248
        %v1365 = vunpack.c.l.b16 %v1249
        %v1366 = vunpack.c.l.b16 %v1250
        %v1367 = vunpack.c.h.b16 %v1250
        %v1368 = vunpack.c.l.b16 %v1251
        %v1369 = vunpack.c.l.b16 %v1252
        %v1370 = vunpack.c.h.b16 %v1252
        %v1371 = vunpack.c.l.b16 %v1253
        %v1372 = vunpack.c.l.b16 %v1254
        %v1373 = vunpack.c.h.b16 %v1254
        %v1374 = vunpack.c.l.b16 %v1255
        %v1375 = vunpack.c.l.b16 %v1256
        %v1376 = vunpack.c.h.b16 %v1256
        %v1377 = vunpack.c.l.b16 %v1257
        %v1378 = vunpack.c.l.b16 %v1258
        %v1379 = vunpack.c.h.b16 %v1258
        %v1380 = vunpack.c.l.b16 %v1259
        %v1381 = vunpack.c.l.b16 %v1260
        %v1382 = vunpack.c.h.b16 %v1260
        %v1383 = vunpack.c.l.b16 %v1261
        %v1384 = vunpack.c.l.b16 %v1262
        %v1385 = vunpack.c.h.b16 %v1262
        %v1386 = vunpack.c.l.b16 %v1263
        %v1387 = vunpack.c.l.b16 %v1264
        %v1388 = vunpack.c.h.b16 %v1264
        %v1389 = vunpack.c.l.b16 %v1265
        %v1390 = vunpack.c.l.b16 %v1266
        %v1391 = vunpack.c.h.b16 %v1266
        %v1392 = vunpack.c.l.b16 %v1267
        %v1393 = vunpack.c.l.b16 %v1268
        %v1394 = vunpack.c.h.b16 %v1268
        %v1395 = vunpack.c.l.b16 %v1269
        %v1396 = vunpack.c.l.b16 %v1270
        %v1397 = vunpack.c.h.b16 %v1270
        %v1398 = vunpack.c.l.b16 %v1271
        %v1399 = vunpack.c.l.b16 %v1272
        %v1400 = vunpack.c.h.b16 %v1272
        %v1401 = vunpack.c.l.b16 %v1273
        %v1402 = vunpack.c.l.b16 %v1274
        %v1403 = vunpack.c.h.b16 %v1274
        %v1404 = vunpack.c.l.b16 %v1275
        %v1405 = vpack.c.b16 %v1360, %v1357
        %v1406 = vpack.c.b16 %v1361, %v1358
        %v1407 = vpack.c.b16 %v1362, %v1359
        %v1408 = vpack.c.b16 %v1366, %v1363
        %v1409 = vpack.c.b16 %v1367, %v1364
        %v1410 = vpack.c.b16 %v1368, %v1365
        %v1411 = vpack.c.b16 %v1372, %v1369
        %v1412 = vpack.c.b16 %v1373, %v1370
        %v1413 = vpack.c.b16 %v1374, %v1371
        %v1414 = vpack.c.b16 %v1378, %v1375
        %v1415 = vpack.c.b16 %v1379, %v1376
        %v1416 = vpack.c.b16 %v1380, %v1377
        %v1417 = vpack.c.b16 %v1384, %v1381
        %v1418 = vpack.c.b16 %v1385, %v1382
        %v1419 = vpack.c.b16 %v1386, %v1383
        %v1420 = vpack.c.b16 %v1390, %v1387
        %v1421 = vpack.c.b16 %v1391, %v1388
        %v1422 = vpack.c.b16 %v1392, %v1389
        %v1423 = vpack.c.b16 %v1396, %v1393
        %v1424 = vpack.c.b16 %v1397, %v1394
        %v1425 = vpack.c.b16 %v1398, %v1395
        %v1426 = vpack.c.b16 %v1402, %v1399
        %v1427 = vpack.c.b16 %v1403, %v1400
        %v1428 = vpack.c.b16 %v1404, %v1401
        %v1501 = vunpack.c.l.b16 %v1277
        %v1502 = vunpack.c.l.b16 %v1278
        %v1503 = vunpack.c.l.b16 %v1279
        %v1504 = vunpack.c.l.b16 %v1280
        %v1505 = vunpack.c.l.b16 %v1281
        %v1506 = vunpack.c.l.b16 %v1282
        %v1507 = vunpack.c.l.b16 %v1283
        %v1508 = vunpack.c.l.b16 %v1284
        %v1509 = vunpack.c.l.b16 %v1285
        %v1510 = vunpack.c.l.b16 %v1286
        %v1511 = vunpack.c.l.b16 %v1287
        %v1512 = vunpack.c.l.b16 %v1288
        %v1513 = vunpack.c.l.b16 %v1289
        %v1514 = vunpack.c.l.b16 %v1290
        %v1515 = vunpack.c.l.b16 %v1291
        %v1516 = vunpack.c.l.b16 %v1292
        %v1517 = vunpack.c.l.b16 %v1293
        %v1518 = vunpack.c.l.b16 %v1294
        %v1519 = vunpack.c.l.b16 %v1295
        %v1520 = vunpack.c.l.b16 %v1296
        %v1521 = vunpack.c.l.b16 %v1297
        %v1522 = vunpack.c.l.b16 %v1298
        %v1523 = vunpack.c.l.b16 %v1299
        %v1524 = vunpack.c.l.b16 %v1300
        %v1525 = vunpack.c.l.b16 %v1301
        %v1526 = vunpack.c.l.b16 %v1302
        %v1527 = vunpack.c.l.b16 %v1303
        %v1528 = vunpack.c.l.b16 %v1304
        %v1529 = vunpack.c.l.b16 %v1305
        %v1530 = vunpack.c.l.b16 %v1306
        %v1531 = vunpack.c.l.b16 %v1307
        %v1532 = vunpack.c.l.b16 %v1308
        %v1533 = vunpack.c.l.b16 %v1309
        %v1534 = vunpack.c.l.b16 %v1310
        %v1535 = vunpack.c.l.b16 %v1311
        %v1536 = vunpack.c.l.b16 %v1312
        %v1537 = vunpack.c.l.b16 %v1313
        %v1538 = vunpack.c.l.b16 %v1314
        %v1539 = vunpack.c.l.b16 %v1315
        %v1540 = vunpack.c.l.b16 %v1316
        %v1541 = vunpack.c.l.b16 %v1317
        %v1542 = vunpack.c.l.b16 %v1318
        %v1543 = vunpack.c.l.b16 %v1319
        %v1544 = vunpack.c.l.b16 %v1320
        %v1545 = vunpack.c.l.b16 %v1321
        %v1546 = vunpack.c.l.b16 %v1322
        %v1547 = vunpack.c.l.b16 %v1323
        %v1548 = vunpack.c.l.b16 %v1324
        %v1549 = vpack.c.b16 %v1502, %v1501
        %v1550 = vpack.c.b16 %v1504, %v1503
        %v1551 = vpack.c.b16 %v1506, %v1505
        %v1552 = vpack.c.b16 %v1508, %v1507
        %v1553 = vpack.c.b16 %v1510, %v1509
        %v1554 = vpack.c.b16 %v1512, %v1511
        %v1555 = vpack.c.b16 %v1514, %v1513
        %v1556 = vpack.c.b16 %v1516, %v1515
        %v1557 = vpack.c.b16 %v1518, %v1517
        %v1558 = vpack.c.b16 %v1520, %v1519
        %v1559 = vpack.c.b16 %v1522, %v1521
        %v1560 = vpack.c.b16 %v1524, %v1523
        %v1561 = vpack.c.b16 %v1526, %v1525
        %v1562 = vpack.c.b16 %v1528, %v1527
        %v1563 = vpack.c.b16 %v1530, %v1529
        %v1564 = vpack.c.b16 %v1532, %v1531
        %v1565 = vpack.c.b16 %v1534, %v1533
        %v1566 = vpack.c.b16 %v1536, %v1535
        %v1567 = vpack.c.b16 %v1538, %v1537
        %v1568 = vpack.c.b16 %v1540, %v1539
        %v1569 = vpack.c.b16 %v1542, %v1541
        %v1570 = vpack.c.b16 %v1544, %v1543
        %v1571 = vpack.c.b16 %v1546, %v1545
        %v1572 = vpack.c.b16 %v1548, %v1547
        %1597 = vmatpush.bf16.msra.mxu0 %v1556
        %1598 = vmatpush.bf16.msra.mxu0 %v1555
        %1599 = vmatpush.bf16.msra.mxu0 %v1554
        %1600 = vmatpush.bf16.msra.mxu0 %v1553
        %1601 = vmatpush.bf16.msra.mxu0 %v1552
        %1602 = vmatpush.bf16.msra.mxu0 %v1551
        %1603 = vmatpush.bf16.msra.mxu0 %v1550
        %1604 = vmatpush.bf16.msra.mxu0 %v1549
        %1605 = vmatmul.bf16.gmra.mxu0 %v1405
        %v1606 = vpop.f32.mrf.mxu0
        %v1607 = vadd.f32 0.0, %v1606
        %v1608 = vpop.f32.mrf.mxu0
        %v1609 = vadd.f32 0.0, %v1608
        %1610 = vmatmul.bf16.gmra.mxu0 %v1408
        %v1611 = vpop.f32.mrf.mxu0
        %v1612 = vadd.f32 0.0, %v1611
        %v1613 = vpop.f32.mrf.mxu0
        %v1614 = vadd.f32 0.0, %v1613
        %1615 = vmatmul.bf16.gmra.mxu0 %v1411
        %v1616 = vpop.f32.mrf.mxu0
        %v1617 = vadd.f32 0.0, %v1616
        %v1618 = vpop.f32.mrf.mxu0
        %v1619 = vadd.f32 0.0, %v1618
        %1620 = vmatmul.bf16.gmra.mxu0 %v1414
        %v1621 = vpop.f32.mrf.mxu0
        %v1622 = vadd.f32 0.0, %v1621
        %v1623 = vpop.f32.mrf.mxu0
        %v1624 = vadd.f32 0.0, %v1623
        %1625 = vmatmul.bf16.gmra.mxu0 %v1417
        %v1626 = vpop.f32.mrf.mxu0
        %v1627 = vadd.f32 0.0, %v1626
        %v1628 = vpop.f32.mrf.mxu0
        %v1629 = vadd.f32 0.0, %v1628
        %1630 = vmatmul.bf16.gmra.mxu0 %v1420
        %v1631 = vpop.f32.mrf.mxu0
        %v1632 = vadd.f32 0.0, %v1631
        %v1633 = vpop.f32.mrf.mxu0
        %v1634 = vadd.f32 0.0, %v1633
        %1635 = vmatmul.bf16.gmra.mxu0 %v1423
        %v1636 = vpop.f32.mrf.mxu0
        %v1637 = vadd.f32 0.0, %v1636
        %v1638 = vpop.f32.mrf.mxu0
        %v1639 = vadd.f32 0.0, %v1638
        %1640 = vmatmul.bf16.gmra.mxu0 %v1426
        %v1641 = vpop.f32.mrf.mxu0
        %v1642 = vadd.f32 0.0, %v1641
        %v1643 = vpop.f32.mrf.mxu0
        %v1644 = vadd.f32 0.0, %v1643
        %1645 = vdwg.mxu0
        %1646 = vmatpush.bf16.msra.mxu0 %v1564
        %1647 = vmatpush.bf16.msra.mxu0 %v1563
        %1648 = vmatpush.bf16.msra.mxu0 %v1562
        %1649 = vmatpush.bf16.msra.mxu0 %v1561
        %1650 = vmatpush.bf16.msra.mxu0 %v1560
        %1651 = vmatpush.bf16.msra.mxu0 %v1559
        %1652 = vmatpush.bf16.msra.mxu0 %v1558
        %1653 = vmatpush.bf16.msra.mxu0 %v1557
        %1654 = vmatmul.bf16.gmra.mxu0 %v1406
        %v1655 = vpop.f32.mrf.mxu0
        %v1656 = vadd.f32 %v1607, %v1655
        %v1657 = vpop.f32.mrf.mxu0
        %v1658 = vadd.f32 %v1609, %v1657
        %1659 = vmatmul.bf16.gmra.mxu0 %v1409
        %v1660 = vpop.f32.mrf.mxu0
        %v1661 = vadd.f32 %v1612, %v1660
        %v1662 = vpop.f32.mrf.mxu0
        %v1663 = vadd.f32 %v1614, %v1662
        %1664 = vmatmul.bf16.gmra.mxu0 %v1412
        %v1665 = vpop.f32.mrf.mxu0
        %v1666 = vadd.f32 %v1617, %v1665
        %v1667 = vpop.f32.mrf.mxu0
        %v1668 = vadd.f32 %v1619, %v1667
        %1669 = vmatmul.bf16.gmra.mxu0 %v1415
        %v1670 = vpop.f32.mrf.mxu0
        %v1671 = vadd.f32 %v1622, %v1670
        %v1672 = vpop.f32.mrf.mxu0
        %v1673 = vadd.f32 %v1624, %v1672
        %1674 = vmatmul.bf16.gmra.mxu0 %v1418
        %v1675 = vpop.f32.mrf.mxu0
        %v1676 = vadd.f32 %v1627, %v1675
        %v1677 = vpop.f32.mrf.mxu0
        %v1678 = vadd.f32 %v1629, %v1677
        %1679 = vmatmul.bf16.gmra.mxu0 %v1421
        %v1680 = vpop.f32.mrf.mxu0
        %v1681 = vadd.f32 %v1632, %v1680
        %v1682 = vpop.f32.mrf.mxu0
        %v1683 = vadd.f32 %v1634, %v1682
        %1684 = vmatmul.bf16.gmra.mxu0 %v1424
        %v1685 = vpop.f32.mrf.mxu0
        %v1686 = vadd.f32 %v1637, %v1685
        %v1687 = vpop.f32.mrf.mxu0
        %v1688 = vadd.f32 %v1639, %v1687
        %1689 = vmatmul.bf16.gmra.mxu0 %v1427
        %v1690 = vpop.f32.mrf.mxu0
        %v1691 = vadd.f32 %v1642, %v1690
        %v1692 = vpop.f32.mrf.mxu0
        %v1693 = vadd.f32 %v1644, %v1692
        %1694 = vdwg.mxu0
        %1695 = vmatpush.bf16.msra.mxu0 %v1572
        %1696 = vmatpush.bf16.msra.mxu0 %v1571
        %1697 = vmatpush.bf16.msra.mxu0 %v1570
        %1698 = vmatpush.bf16.msra.mxu0 %v1569
        %1699 = vmatpush.bf16.msra.mxu0 %v1568
        %1700 = vmatpush.bf16.msra.mxu0 %v1567
        %1701 = vmatpush.bf16.msra.mxu0 %v1566
        %1702 = vmatpush.bf16.msra.mxu0 %v1565
        %1703 = vmatmul.bf16.gmra.mxu0 %v1407
        %v1704 = vpop.f32.mrf.mxu0
        %v1705 = vadd.f32 %v1656, %v1704
        %v1706 = vpop.f32.mrf.mxu0
        %v1707 = vadd.f32 %v1658, %v1706
        %1708 = vmatmul.bf16.gmra.mxu0 %v1410
        %v1709 = vpop.f32.mrf.mxu0
        %v1710 = vadd.f32 %v1661, %v1709
        %v1711 = vpop.f32.mrf.mxu0
        %v1712 = vadd.f32 %v1663, %v1711
        %1713 = vmatmul.bf16.gmra.mxu0 %v1413
        %v1714 = vpop.f32.mrf.mxu0
        %v1715 = vadd.f32 %v1666, %v1714
        %v1716 = vpop.f32.mrf.mxu0
        %v1717 = vadd.f32 %v1668, %v1716
        %1718 = vmatmul.bf16.gmra.mxu0 %v1416
        %v1719 = vpop.f32.mrf.mxu0
        %v1720 = vadd.f32 %v1671, %v1719
        %v1721 = vpop.f32.mrf.mxu0
        %v1722 = vadd.f32 %v1673, %v1721
        %1723 = vmatmul.bf16.gmra.mxu0 %v1419
        %v1724 = vpop.f32.mrf.mxu0
        %v1725 = vadd.f32 %v1676, %v1724
        %v1726 = vpop.f32.mrf.mxu0
        %v1727 = vadd.f32 %v1678, %v1726
        %1728 = vmatmul.bf16.gmra.mxu0 %v1422
        %v1729 = vpop.f32.mrf.mxu0
        %v1730 = vadd.f32 %v1681, %v1729
        %v1731 = vpop.f32.mrf.mxu0
        %v1732 = vadd.f32 %v1683, %v1731
        %1733 = vmatmul.bf16.gmra.mxu0 %v1425
        %v1734 = vpop.f32.mrf.mxu0
        %v1735 = vadd.f32 %v1686, %v1734
        %v1736 = vpop.f32.mrf.mxu0
        %v1737 = vadd.f32 %v1688, %v1736
        %1738 = vmatmul.bf16.gmra.mxu0 %v1428
        %v1739 = vpop.f32.mrf.mxu0
        %v1740 = vadd.f32 %v1691, %v1739
        %v1741 = vpop.f32.mrf.mxu0
        %v1742 = vadd.f32 %v1693, %v1741
        %1743 = vdwg.mxu0
        %v1744 = vadd.f32 %v1204, %v1705
        %v1745 = vadd.f32 %v1206, %v1707
        %v1746 = vadd.f32 %v1209, %v1710
        %v1747 = vadd.f32 %v1211, %v1712
        %v1748 = vadd.f32 %v1214, %v1715
        %v1749 = vadd.f32 %v1216, %v1717
        %v1750 = vadd.f32 %v1219, %v1720
        %v1751 = vadd.f32 %v1221, %v1722
        %v1752 = vadd.f32 %v1224, %v1725
        %v1753 = vadd.f32 %v1226, %v1727
        %v1754 = vadd.f32 %v1229, %v1730
        %v1755 = vadd.f32 %v1231, %v1732
        %v1756 = vadd.f32 %v1234, %v1735
        %v1757 = vadd.f32 %v1236, %v1737
        %v1758 = vadd.f32 %v1239, %v1740
        %v1759 = vadd.f32 %v1241, %v1742
        %v1760 = vld [vmem:[%s242] sm:$0x1]
        %v1762 = vperm.slane %v1760, 0
        %v1764 = vadd.f32 %v1744, %v1762
        %v1765 = vadd.f32 %v1745, %v1762
        %v1766 = vadd.f32 %v1746, %v1762
        %v1767 = vadd.f32 %v1747, %v1762
        %v1768 = vadd.f32 %v1748, %v1762
        %v1769 = vadd.f32 %v1749, %v1762
        %v1770 = vadd.f32 %v1750, %v1762
        %v1771 = vadd.f32 %v1751, %v1762
        %v1772 = vadd.f32 %v1752, %v1762
        %v1773 = vadd.f32 %v1753, %v1762
        %v1774 = vadd.f32 %v1754, %v1762
        %v1775 = vadd.f32 %v1755, %v1762
        %v1776 = vadd.f32 %v1756, %v1762
        %v1777 = vadd.f32 %v1757, %v1762
        %v1778 = vadd.f32 %v1758, %v1762
        %v1779 = vadd.f32 %v1759, %v1762
        %v1780 = vsub.f32 0.0, %v1764
        %v1781 = vsub.f32 0.0, %v1765
        %v1782 = vsub.f32 0.0, %v1766
        %v1783 = vsub.f32 0.0, %v1767
        %v1784 = vsub.f32 0.0, %v1768
        %v1785 = vsub.f32 0.0, %v1769
        %v1786 = vsub.f32 0.0, %v1770
        %v1787 = vsub.f32 0.0, %v1771
        %v1788 = vsub.f32 0.0, %v1772
        %v1789 = vsub.f32 0.0, %v1773
        %v1790 = vsub.f32 0.0, %v1774
        %v1791 = vsub.f32 0.0, %v1775
        %v1792 = vsub.f32 0.0, %v1776
        %v1793 = vsub.f32 0.0, %v1777
        %v1794 = vsub.f32 0.0, %v1778
        %v1795 = vsub.f32 0.0, %v1779
        %v1796 = vmul.f32 %v1780, 1.442695
        %v1797 = vpow.pop %v1796
        %v1798 = vmul.f32 %v1781, 1.442695
        %v1799 = vpow.pop %v1798
        %v1800 = vmul.f32 %v1782, 1.442695
        %v1801 = vpow.pop %v1800
        %v1802 = vmul.f32 %v1783, 1.442695
        %v1803 = vpow.pop %v1802
        %v1804 = vmul.f32 %v1784, 1.442695
        %v1805 = vpow.pop %v1804
        %v1806 = vmul.f32 %v1785, 1.442695
        %v1807 = vpow.pop %v1806
        %v1808 = vmul.f32 %v1786, 1.442695
        %v1809 = vpow.pop %v1808
        %v1810 = vmul.f32 %v1787, 1.442695
        %v1811 = vpow.pop %v1810
        %v1812 = vmul.f32 %v1788, 1.442695
        %v1813 = vpow.pop %v1812
        %v1814 = vmul.f32 %v1789, 1.442695
        %v1815 = vpow.pop %v1814
        %v1816 = vmul.f32 %v1790, 1.442695
        %v1817 = vpow.pop %v1816
        %v1818 = vmul.f32 %v1791, 1.442695
        %v1819 = vpow.pop %v1818
        %v1820 = vmul.f32 %v1792, 1.442695
        %v1821 = vpow.pop %v1820
        %v1822 = vmul.f32 %v1793, 1.442695
        %v1823 = vpow.pop %v1822
        %v1824 = vmul.f32 %v1794, 1.442695
        %v1825 = vpow.pop %v1824
        %v1826 = vmul.f32 %v1795, 1.442695
        %v1827 = vpow.pop %v1826
        %v1828 = vadd.f32 %v1797, 1.0
        %v1829 = vadd.f32 %v1799, 1.0
        %v1830 = vadd.f32 %v1801, 1.0
        %v1831 = vadd.f32 %v1803, 1.0
        %v1832 = vadd.f32 %v1805, 1.0
        %v1833 = vadd.f32 %v1807, 1.0
        %v1834 = vadd.f32 %v1809, 1.0
        %v1835 = vadd.f32 %v1811, 1.0
        %v1836 = vadd.f32 %v1813, 1.0
        %v1837 = vadd.f32 %v1815, 1.0
        %v1838 = vadd.f32 %v1817, 1.0
        %v1839 = vadd.f32 %v1819, 1.0
        %v1840 = vadd.f32 %v1821, 1.0
        %v1841 = vadd.f32 %v1823, 1.0
        %v1842 = vadd.f32 %v1825, 1.0
        %v1843 = vadd.f32 %v1827, 1.0
        %v1844 = vrcp.pop %v1828
        %v1845 = vrcp.pop %v1829
        %v1846 = vrcp.pop %v1830
        %v1847 = vrcp.pop %v1831
        %v1848 = vrcp.pop %v1832
        %v1849 = vrcp.pop %v1833
        %v1850 = vrcp.pop %v1834
        %v1851 = vrcp.pop %v1835
        %v1852 = vrcp.pop %v1836
        %v1853 = vrcp.pop %v1837
        %v1854 = vrcp.pop %v1838
        %v1855 = vrcp.pop %v1839
        %v1856 = vrcp.pop %v1840
        %v1857 = vrcp.pop %v1841
        %v1858 = vrcp.pop %v1842
        %v1859 = vrcp.pop %v1843
        %v1860 = vmul.f32 %v1764, %v1844
        %v1861 = vmul.f32 %v1765, %v1845
        %v1862 = vmul.f32 %v1766, %v1846
        %v1863 = vmul.f32 %v1767, %v1847
        %v1864 = vmul.f32 %v1768, %v1848
        %v1865 = vmul.f32 %v1769, %v1849
        %v1866 = vmul.f32 %v1770, %v1850
        %v1867 = vmul.f32 %v1771, %v1851
        %v1868 = vmul.f32 %v1772, %v1852
        %v1869 = vmul.f32 %v1773, %v1853
        %v1870 = vmul.f32 %v1774, %v1854
        %v1871 = vmul.f32 %v1775, %v1855
        %v1872 = vmul.f32 %v1776, %v1856
        %v1873 = vmul.f32 %v1777, %v1857
        %v1874 = vmul.f32 %v1778, %v1858
        %v1875 = vmul.f32 %v1779, %v1859
        %1876 = vst [vmem:[%s239] sm:$0xff] %v1860
        %1877 = vst [vmem:[%s239 + $0x8] sm:$0xff] %v1861
        %1878 = vst [vmem:[%s239 + $0x10] sm:$0xff] %v1862
        %1879 = vst [vmem:[%s239 + $0x18] sm:$0xff] %v1863
        %1880 = vst [vmem:[%s239 + $0x20] sm:$0xff] %v1864
        %1881 = vst [vmem:[%s239 + $0x28] sm:$0xff] %v1865
        %1882 = vst [vmem:[%s239 + $0x30] sm:$0xff] %v1866
        %1883 = vst [vmem:[%s239 + $0x38] sm:$0xff] %v1867
        %1884 = vst [vmem:[%s239 + $0x40] sm:$0xff] %v1868
        %1885 = vst [vmem:[%s239 + $0x48] sm:$0xff] %v1869
        %1886 = vst [vmem:[%s239 + $0x50] sm:$0xff] %v1870
        %1887 = vst [vmem:[%s239 + $0x58] sm:$0xff] %v1871
        %1888 = vst [vmem:[%s239 + $0x60] sm:$0xff] %v1872
        %1889 = vst [vmem:[%s239 + $0x68] sm:$0xff] %v1873
        %1890 = vst [vmem:[%s239 + $0x70] sm:$0xff] %v1874
        %1891 = vst [vmem:[%s239 + $0x78] sm:$0xff] %v1875
        %s1892 = sand.u32 %s121, 1
        %s1893 = scalar_lea.sflag [#allocation4], %s1892
        %s1894 = sand.u32 %s121, 1
        %s1895 = smul.addr %s1894, 128
        %s1896 = scalar_lea.vmem [#allocation7], %s1895
        // Predicated region
        $region41: #{tpu_custom_call.1} parent=31 // pred_check
          %p1897 = pneg %p131
        $region42: #{tpu_custom_call.1} parent=31 // pred_check_branch
          %1899 = sbr.rel (%p1897) target = $region44
        $region43: #{tpu_custom_call.1} parent=31 // pred_region
          %1901 = vsyncadd %s1893, 0
          %s1902 = smul.addr %s25, 16
          %s1903 = sadd.s32 %s26, %s1902
          %s1904 = smul.addr %s1903, 8
          %s1905 = scalar_lea.hbm %s3, %s1904
          %s1906 = sshll.u32 %s1896, 4
          %s1907 = int_to_ptr.vmem [resolvable:$true] %s1906
          %s1908 = sshll.u32 %s1905, 4
          %s1909 = int_to_ptr.hbm [resolvable:$true] %s1908
          %1914 = dma.vmem_to_hbm [thread:$0]  %s1907, 2048, %s1909, %s1893, 128, 128, 8
        $region44: #{tpu_custom_call.1} parent=31 // pred_fallthru
          _
      $region32: #{tpu_custom_call.1} parent=5 // pred_fallthru
        _
      %p1915 = scmp.le.s32.totalorder 2, %s16
      // Predicated region
      $region45: #{tpu_custom_call.1} parent=5 // pred_check
        %p1916 = pneg %p1915
      $region46: #{tpu_custom_call.1} parent=5 // pred_check_branch
        %1918 = sbr.rel (%p1916) target = $region48
      $region47: #{tpu_custom_call.1} parent=5 // pred_region
        %s1919 = ssub.s32 %s16, 2
        // Predicated region
        $region49: #{tpu_custom_call.1} parent=47 // pred_check
          %p1920 = pneg %p137
        $region50: #{tpu_custom_call.1} parent=47 // pred_check_branch
          %1922 = sbr.rel (%p1920) target = $region52
        $region51: #{tpu_custom_call.1} parent=47 // pred_region
          %s1923 = sand.u32 %s122, 1
          %s1924 = scalar_lea.sflag [#allocation4], %s1923
          %s1925 = sand.u32 %s122, 1
          %s1926 = smul.addr %s1925, 128
          %s1927 = scalar_lea.vmem [#allocation7], %s1926
          %1929 = dma.done %s1924, 2048
        $region52: #{tpu_custom_call.1} parent=47 // pred_fallthru
          _
      $region48: #{tpu_custom_call.1} parent=5 // pred_fallthru
        _
    $region6: #{tpu_custom_call.1} parent=1 // loop_footer
      %s20 = sadd.s32 1, %s16
    $region7: #{tpu_custom_call.1} parent=1 // loop_footer_branch
      %15 = sbr.rel target = $region3
    $region8: #{tpu_custom_call.1} parent=1 // loop_exit
      _
    %1930 = vsyncpa [#allocation3], 1
    %s1931 = scalar_lea.sflag [#allocation3], 1
    %1932 = vsyncpa %s1931, 1
    %1933 = vsyncpa [#allocation6], 1
    %1934 = vsyncpa [#allocation4], 1
    %s1935 = scalar_lea.sflag [#allocation4], 1
    %1936 = vsyncpa %s1935, 1

</llo_original>
